<compile_context>
chip_gen: v5e
topology: v5e:2x2
jax: 0.10.0
libtpu: 0.0.40
codegen_flags: <defaults>
</compile_context>

<pallas_src>
import functools

import jax
import jax.numpy as jnp
from jax import lax
from jax.experimental import pallas as pl
from jax.experimental.pallas import tpu as pltpu

LANES = 128  # feature dims are zero-padded to one full lane group


def _round_up(x, m):
    return ((x + m - 1) // m) * m


def _choose_tiles(n):
    # (row tile tm: sublane axis, x8) x (source/reduction tile tk: lane axis, x128).
    # Bigger tiles cut per-grid-step overhead (~0.35 us) and give long contiguous DMA
    # runs, but n_pad = round_up(n, max(tm, tk)) must not inflate the dense N^2 A_hat
    # for small/medium n.
    n = max(n, 1)
    if n <= 256:
        tm, tk = 128, 128
    elif n <= 1024:
        tm, tk = 256, 256
    elif n <= 4096:
        tm, tk = 256, 512
    elif n <= 16384:
        tm, tk = 512, 1024
    else:
        tm, tk = 512, 2048
    n_pad = _round_up(n, max(tm, tk))
    return tm, tk, n_pad


def _vmem_limit_bytes():
    # v5e/v6e: 128 MiB physical VMEM; v7x: 64 MiB. Leave headroom under each.
    try:
        cap = pltpu.get_tpu_info().vmem_capacity_bytes
    except Exception:
        return 48 * 1024 * 1024          # conservative: valid on every generation
    if cap <= 64 * 1024 * 1024:          # v7x
        return 48 * 1024 * 1024
    return 96 * 1024 * 1024              # v5e / v6e


def _pad2d(a, rows, cols):
    a = jnp.asarray(a, jnp.float32)
    if a.ndim == 1:
        a = a[None, :]
    return jnp.zeros((rows, cols), jnp.float32).at[: a.shape[0], : a.shape[1]].set(a)


# ----------------------------- fused encode kernel ---------------------------------
#
# grid = (phase, row_tile, src_tile)   -- phase outermost, reduction axis last
#   phase 0 : h_raw = A_hat @ (X @ W0^T)           (GCNConv 0; b0 cancels under BN)
#             accumulate per-feature sum / sum-of-squares (BN batch stats)
#   phase 1 : finalize BN stats once; normalize+ReLU each tk-row block of h just
#             before its first use (i == 0 sweep); z = A_hat @ h_norm @ W1^T + b1.

def _encode_kernel(inv_n, a_resident,
                   a_ref, xw0_ref, gamma_ref, beta_ref, w1t_ref, b1_ref,
                   z_ref,
                   acc_ref, h_ref, sum_ref, sumsq_ref, scale_ref, shift_ref):
    p = pl.program_id(0)
    i = pl.program_id(1)
    k = pl.program_id(2)
    nk = pl.num_programs(2)
    tm = acc_ref.shape[0]
    tk = xw0_ref.shape[0]

    def a_block():
        # Streamed: a_ref is the (tm, tk) tile. Resident: a_ref is the whole padded
        # A_hat kept in VMEM across both phases; slice the tile out on-chip.
        if a_resident:
            r0 = pl.multiple_of(i * tm, tm)
            c0 = pl.multiple_of(k * tk, tk)
            return a_ref[pl.ds(r0, tm), pl.ds(c0, tk)]
        return a_ref[...]

    @pl.when(k == 0)
    def _():                                    # new (phase, row-tile) k-sweep
        acc_ref[...] = jnp.zeros_like(acc_ref)

    @pl.when((p == 0) & (i == 0) & (k == 0))
    def _():                                    # once, at the very first grid step
        sum_ref[...] = jnp.zeros_like(sum_ref)
        sumsq_ref[...] = jnp.zeros_like(sumsq_ref)

    # ------------------------------ phase 0: conv0 ------------------------------
    @pl.when(p == 0)
    def _():
        # bf16 x bf16 on the MXU, f32 accumulate
        acc_ref[...] += jnp.dot(a_block(), xw0_ref[...],
                                preferred_element_type=jnp.float32)

        @pl.when(k == nk - 1)
        def _():
            h_raw = acc_ref[...]
            row0 = pl.multiple_of(i * tm, tm)
            h_ref[pl.ds(row0, tm), :] = h_raw.astype(h_ref.dtype)
            # Padded rows of A_hat are all-zero and b0 was dropped, so h_raw is
            # exactly 0 on padded rows/lanes -> no row mask needed for the stats.
            sum_ref[...] += jnp.sum(h_raw, axis=0, keepdims=True)
            sumsq_ref[...] += jnp.sum(h_raw * h_raw, axis=0, keepdims=True)

    # ------------------------ phase 1: BN + ReLU + conv1 ------------------------
    @pl.when(p == 1)
    def _():
        row0 = pl.multiple_of(k * tk, tk)

        @pl.when(i == 0)
        def _():
            @pl.when(k == 0)
            def _():
                # training-mode BatchNorm1d: batch mean, biased variance, eps=1e-5
                mean = sum_ref[...] * inv_n
                var = jnp.maximum(sumsq_ref[...] * inv_n - mean * mean, 0.0)
                scale = gamma_ref[...] * lax.rsqrt(var + 1e-5)
                scale_ref[...] = scale
                shift_ref[...] = beta_ref[...] - mean * scale

            # normalize + ReLU this tk-row block of h in place, just before its
            # first use (distributed over the i==0 sweep -> hidden under A DMA).
            hb = h_ref[pl.ds(row0, tk), :].astype(jnp.float32)
            hn = jnp.maximum(hb * scale_ref[...] + shift_ref[...], 0.0)
            h_ref[pl.ds(row0, tk), :] = hn.astype(h_ref.dtype)

        acc_ref[...] += jnp.dot(a_block(), h_ref[pl.ds(row0, tk), :],
                                preferred_element_type=jnp.float32)

        @pl.when(k == nk - 1)
        def _():
            z_ref[...] = (jnp.dot(acc_ref[...], w1t_ref[...],
                                  preferred_element_type=jnp.float32) + b1_ref[...])


def encode_pallas(a_pad, xw0_pad, gamma, beta, w1t, b1, *,
                  n_real, tm, tk, a_resident=None):
    n_pad = a_pad.shape[0]
    assert n_pad % tm == 0 and n_pad % tk == 0
    grid = (2, n_pad // tm, n_pad // tk)
    vmem_limit = _vmem_limit_bytes()

    if a_resident is None:
        # Keep A_hat VMEM-resident across both phases when it fits comfortably
        # (budget assumes double buffering of the invariant block + the h scratch).
        a_bytes = 2 * n_pad * n_pad * 2          # 2 buffers x bf16
        h_bytes = n_pad * LANES * 2              # bf16 hidden activations
        a_resident = (a_bytes + h_bytes) <= (vmem_limit // 2)

    if a_resident:
        a_spec = pl.BlockSpec((n_pad, n_pad), lambda p, i, k: (0, 0))  # fetched once
    else:
        a_spec = pl.BlockSpec((tm, tk), lambda p, i, k: (i, k))        # streamed

    kernel = functools.partial(_encode_kernel, 1.0 / float(n_real), bool(a_resident))
    return pl.pallas_call(
        kernel,
        out_shape=jax.ShapeDtypeStruct((n_pad, LANES), jnp.float32),
        grid_spec=pltpu.PrefetchScalarGridSpec(
            num_scalar_prefetch=0,
            grid=grid,
            in_specs=[
                a_spec,                                                       # A_hat (bf16)
                pl.BlockSpec((tk, LANES), lambda p, i, k: (k * (1 - p), 0)),  # XW0 (phase 0)
                pl.BlockSpec((1, LANES), lambda p, i, k: (0, 0)),             # gamma
                pl.BlockSpec((1, LANES), lambda p, i, k: (0, 0)),             # beta
                pl.BlockSpec((LANES, LANES), lambda p, i, k: (0, 0)),         # W1^T
                pl.BlockSpec((1, LANES), lambda p, i, k: (0, 0)),             # b1
            ],
            # pinned to block 0 during phase 0 -> no junk write-backs before phase 1
            out_specs=pl.BlockSpec((tm, LANES), lambda p, i, k: (i * p, 0)),
            scratch_shapes=[
                pltpu.VMEM((tm, LANES), jnp.float32),      # matmul accumulator (f32)
                pltpu.VMEM((n_pad, LANES), jnp.bfloat16),  # hidden activation (bf16)
                pltpu.VMEM((1, LANES), jnp.float32),       # BN sum (f32)
                pltpu.VMEM((1, LANES), jnp.float32),       # BN sum of squares (f32)
                pltpu.VMEM((1, LANES), jnp.float32),       # BN scale (finalized)
                pltpu.VMEM((1, LANES), jnp.float32),       # BN shift (finalized)
            ],
        ),
        compiler_params=pltpu.CompilerParams(
            dimension_semantics=("arbitrary", "arbitrary", "arbitrary"),
            vmem_limit_bytes=vmem_limit,
        ),
    )(a_pad, xw0_pad, gamma, beta, w1t, b1)


# -------------------------------- JAX-side glue -------------------------------------

def normalized_adjacency(edge_index, num_nodes):
    # PyG gcn_norm: add self-loops, A_hat = D^-1/2 (A+I) D^-1/2,
    # with A_hat[target, source] so aggregation is source -> target.
    src, dst = edge_index[0], edge_index[1]
    loops = jnp.arange(num_nodes, dtype=edge_index.dtype)
    src = jnp.concatenate([src, loops])
    dst = jnp.concatenate([dst, loops])
    adj = jnp.zeros((num_nodes, num_nodes), jnp.float32).at[dst, src].add(1.0)
    deg = adj.sum(axis=1)
    dinv = lax.rsqrt(deg)          # deg >= 1 thanks to self-loops
    return dinv[:, None] * adj * dinv[None, :]


def gcn_forward(params, x, edge_index, *, num_nodes, a_resident=None):
    hidden = params["w0"].shape[0]
    fin = x.shape[1]
    assert hidden <= LANES and fin <= LANES
    tm, tk, n_pad = _choose_tiles(num_nodes)

    a_hat = normalized_adjacency(edge_index, num_nodes)
    a_pad = jnp.zeros((n_pad, n_pad), jnp.bfloat16).at[:num_nodes, :num_nodes].set(
        a_hat.astype(jnp.bfloat16))

    # XW0 = X @ W0^T precomputed in XLA (tiny (N,F_in)x(F_in,H)); b0 is dropped since
    # training-mode BatchNorm removes any per-feature constant exactly.
    xw0 = x.astype(jnp.float32) @ params["w0"].T.astype(jnp.float32)
    xw0_pad = jnp.zeros((n_pad, LANES), jnp.bfloat16).at[:num_nodes, :hidden].set(
        xw0.astype(jnp.bfloat16))

    w1t = _pad2d(params["w1"].T, LANES, LANES)
    b1 = _pad2d(params["b1"], 1, LANES)
    gamma = _pad2d(params["bn1_gamma"], 1, LANES)
    beta = _pad2d(params["bn1_beta"], 1, LANES)

    z_pad = encode_pallas(a_pad, xw0_pad, gamma, beta, w1t, b1,
                          n_real=num_nodes, tm=tm, tk=tk, a_resident=a_resident)
    z = z_pad[:num_nodes, :hidden]

    # decode: gather + multiply + reduce stays in plain JAX (XLA fuses it); a
    # standalone Pallas call would pay launch overhead + masked (E,1) stores.
    return jnp.sum(z[edge_index[0]] * z[edge_index[1]], axis=-1)
    # TODO(synk): self.dropout is stored but never applied in the reference forward.


# ------------------------------------- main -----------------------------------------

if __name__ == "__main__":
    key = jax.random.PRNGKey(0)

    input_dim = 5     # umap n_components=5
    hidden_dim = 64   # hidden_dim from the spec
    num_groups = 8    # convs[2] output dim (never used in forward)
    dropout = 0.5     # stored but never used in forward

    keys = jax.random.split(key, 8)

    def lin_init(k, fan_out, fan_in):
        return jax.random.normal(k, (fan_out, fan_in), jnp.float32) / jnp.sqrt(float(fan_in))

    params = {
        "w0": lin_init(keys[0], hidden_dim, input_dim),
        "b0": jnp.zeros((hidden_dim,), jnp.float32),
        "w1": lin_init(keys[1], hidden_dim, hidden_dim),
        "b1": jnp.zeros((hidden_dim,), jnp.float32),
        "bn1_gamma": jnp.ones((hidden_dim,), jnp.float32),
        "bn1_beta": jnp.zeros((hidden_dim,), jnp.float32),
        # present in __init__ but never used by the reference forward:
        "w2_unused": lin_init(keys[2], num_groups, hidden_dim),
        "b2_unused": jnp.zeros((num_groups,), jnp.float32),
        "bn0_gamma_unused": jnp.ones((hidden_dim,), jnp.float32),
        "bn0_beta_unused": jnp.zeros((hidden_dim,), jnp.float32),
    }

    def reference(params, x, edge_index, n):
        a = normalized_adjacency(edge_index, n)
        h = a @ (x @ params["w0"].T) + params["b0"]
        mu = h.mean(axis=0, keepdims=True)
        var = ((h - mu) ** 2).mean(axis=0, keepdims=True)
        h = jnp.maximum((h - mu) * lax.rsqrt(var + 1e-5)
                        * params["bn1_gamma"] + params["bn1_beta"], 0.0)
        z = a @ (h @ params["w1"].T) + params["b1"]
        return jnp.sum(z[edge_index[0]] * z[edge_index[1]], axis=-1)

    fwd = jax.jit(gcn_forward, static_argnames=("num_nodes", "a_resident"))

    # (num_nodes, num_edges, a_resident): the small spec-sized case plus a multi-tile
    # case exercising BOTH the VMEM-resident and the streamed A_hat code paths.
    cases = [(16, 24, None), (300, 96, True), (300, 96, False)]

    data_key = keys[3]
    for n, e, resident in cases:
        data_key, kx, ks, kd = jax.random.split(data_key, 4)
        x = jax.random.normal(kx, (n, input_dim), jnp.float32)
        edge_index = jnp.stack([
            jax.random.randint(ks, (e,), 0, n, jnp.int32),
            jax.random.randint(kd, (e,), 0, n, jnp.int32),
        ])

        link_logits = fwd(params, x, edge_index, num_nodes=n, a_resident=resident)
        jax.block_until_ready(link_logits)
        assert link_logits.shape == (e,)

        # loose numerical sanity check against a pure-JAX f32 reference
        # (kernel uses bf16 A_hat / XW0 / h on the MXU, hence the wide tolerance)
        ref = reference(params, x, edge_index, n)
        assert jnp.allclose(link_logits, ref, atol=0.5, rtol=0.1), (
            n, resident, float(jnp.max(jnp.abs(link_logits - ref))))

    print("KERNEL_OK")
</pallas_src>

<mosaic_0001>
module attributes {stable_mosaic.version = 11 : i64} {
  func.func @_encode_kernel(%arg0: i32, %arg1: i32, %arg2: i32, %arg3: memref<128x128xbf16, #tpu.memory_space<vmem>>, %arg4: memref<128x128xbf16, #tpu.memory_space<vmem>>, %arg5: memref<1x128xf32, #tpu.memory_space<vmem>>, %arg6: memref<1x128xf32, #tpu.memory_space<vmem>>, %arg7: memref<128x128xf32, #tpu.memory_space<vmem>>, %arg8: memref<1x128xf32, #tpu.memory_space<vmem>>, %arg9: memref<128x128xf32, #tpu.memory_space<vmem>>, %arg10: memref<128x128xf32, #tpu.memory_space<vmem>>, %arg11: memref<128x128xbf16, #tpu.memory_space<vmem>>, %arg12: memref<1x128xf32, #tpu.memory_space<vmem>>, %arg13: memref<1x128xf32, #tpu.memory_space<vmem>>, %arg14: memref<1x128xf32, #tpu.memory_space<vmem>>, %arg15: memref<1x128xf32, #tpu.memory_space<vmem>>) attributes {dimension_semantics = [#tpu.dimension_semantics<arbitrary>, #tpu.dimension_semantics<arbitrary>, #tpu.dimension_semantics<arbitrary>], iteration_bounds = array<i64: 2, 1, 1>, scalar_prefetch = 0 : i64, scratch_operands = 6 : i64, tpu.core_type = #tpu.core_type<tc>, window_params = [{pipeline_mode = #tpu.pipeline_mode<synchronous>, transform_indices = @transform_0, window_bounds = array<i64: 128, 128>}, {transform_indices = @transform_1, window_bounds = array<i64: 128, 128>}, {pipeline_mode = #tpu.pipeline_mode<synchronous>, transform_indices = @transform_2, window_bounds = array<i64: 1, 128>}, {pipeline_mode = #tpu.pipeline_mode<synchronous>, transform_indices = @transform_3, window_bounds = array<i64: 1, 128>}, {pipeline_mode = #tpu.pipeline_mode<synchronous>, transform_indices = @transform_4, window_bounds = array<i64: 128, 128>}, {pipeline_mode = #tpu.pipeline_mode<synchronous>, transform_indices = @transform_5, window_bounds = array<i64: 1, 128>}, {transform_indices = @transform_6, window_bounds = array<i64: 128, 128>}]} {
    %c0_i32 = arith.constant 0 : i32
    %0 = arith.cmpi eq, %arg2, %c0_i32 : i32
    %1 = arith.extui %0 : i1 to i32
    %c0_i32_0 = arith.constant 0 : i32
    %2 = arith.cmpi ne, %1, %c0_i32_0 : i32
    scf.if %2 {
      %cst = arith.constant 0.000000e+00 : f32
      %16 = vector.broadcast %cst : f32 to vector<128x128xf32>
      %c0 = arith.constant 0 : index
      %c0_8 = arith.constant 0 : index
      %17 = vector.load %arg10[%c0, %c0_8] : memref<128x128xf32, #tpu.memory_space<vmem>>, vector<128x128xf32>
      tpu.vector_store %arg10[%c0, %c0_8], %16 {strides = array<i32>} : memref<128x128xf32, #tpu.memory_space<vmem>>, vector<128x128xf32>,
    } else {
    }
    %c0_i32_1 = arith.constant 0 : i32
    %3 = arith.cmpi eq, %arg0, %c0_i32_1 : i32
    %c0_i32_2 = arith.constant 0 : i32
    %4 = arith.cmpi eq, %arg1, %c0_i32_2 : i32
    %5 = arith.andi %3, %4 : i1
    %c0_i32_3 = arith.constant 0 : i32
    %6 = arith.cmpi eq, %arg2, %c0_i32_3 : i32
    %7 = arith.andi %5, %6 : i1
    %8 = arith.extui %7 : i1 to i32
    %c0_i32_4 = arith.constant 0 : i32
    %9 = arith.cmpi ne, %8, %c0_i32_4 : i32
    scf.if %9 {
      %cst = arith.constant 0.000000e+00 : f32
      %16 = vector.broadcast %cst : f32 to vector<1x128xf32>
      %c0 = arith.constant 0 : index
      %c0_8 = arith.constant 0 : index
      %17 = vector.load %arg12[%c0, %c0_8] : memref<1x128xf32, #tpu.memory_space<vmem>>, vector<1x128xf32>
      tpu.vector_store %arg12[%c0, %c0_8], %16 {strides = array<i32>} : memref<1x128xf32, #tpu.memory_space<vmem>>, vector<1x128xf32>,
      %cst_9 = arith.constant 0.000000e+00 : f32
      %18 = vector.broadcast %cst_9 : f32 to vector<1x128xf32>
      %c0_10 = arith.constant 0 : index
      %c0_11 = arith.constant 0 : index
      %19 = vector.load %arg13[%c0_10, %c0_11] : memref<1x128xf32, #tpu.memory_space<vmem>>, vector<1x128xf32>
      tpu.vector_store %arg13[%c0_10, %c0_11], %18 {strides = array<i32>} : memref<1x128xf32, #tpu.memory_space<vmem>>, vector<1x128xf32>,
    } else {
    }
    %c0_i32_5 = arith.constant 0 : i32
    %10 = arith.cmpi eq, %arg0, %c0_i32_5 : i32
    %11 = arith.extui %10 : i1 to i32
    %c0_i32_6 = arith.constant 0 : i32
    %12 = arith.cmpi ne, %11, %c0_i32_6 : i32
    scf.if %12 {
      %c0 = arith.constant 0 : index
      %c0_8 = arith.constant 0 : index
      %16 = vector.load %arg10[%c0, %c0_8] : memref<128x128xf32, #tpu.memory_space<vmem>>, vector<128x128xf32>
      %c128_i32 = arith.constant 128 : i32
      %17 = arith.muli %arg1, %c128_i32 : i32
      %18 = tpu.assume_multiple %17, 128 : i32
      %c128_i32_9 = arith.constant 128 : i32
      %19 = arith.muli %arg2, %c128_i32_9 : i32
      %20 = tpu.assume_multiple %19, 128 : i32
      %21 = arith.index_cast %18 : i32 to index
      %22 = arith.index_cast %20 : i32 to index
      %23 = vector.load %arg3[%21, %22] : memref<128x128xbf16, #tpu.memory_space<vmem>>, vector<128x128xbf16>
      %c0_10 = arith.constant 0 : index
      %c0_11 = arith.constant 0 : index
      %24 = vector.load %arg4[%c0_10, %c0_11] : memref<128x128xbf16, #tpu.memory_space<vmem>>, vector<128x128xbf16>
      %cst = arith.constant dense<0.000000e+00> : vector<128x128xf32>
      %25 = tpu.matmul %23, %24, %cst {dimension_numbers = #tpu.dot_dimension_numbers<[1], [0], [0], [1], [0, 0, 1, 1], [], []>} : vector<128x128xbf16>, vector<128x128xbf16>, vector<128x128xf32> -> vector<128x128xf32>
      %26 = arith.addf %16, %25 : vector<128x128xf32>
      %c0_12 = arith.constant 0 : index
      %c0_13 = arith.constant 0 : index
      %27 = vector.load %arg10[%c0_12, %c0_13] : memref<128x128xf32, #tpu.memory_space<vmem>>, vector<128x128xf32>
      tpu.vector_store %arg10[%c0_12, %c0_13], %26 {strides = array<i32>} : memref<128x128xf32, #tpu.memory_space<vmem>>, vector<128x128xf32>,
      %c0_i32_14 = arith.constant 0 : i32
      %28 = arith.cmpi eq, %arg2, %c0_i32_14 : i32
      %29 = arith.extui %28 : i1 to i32
      %c0_i32_15 = arith.constant 0 : i32
      %30 = arith.cmpi ne, %29, %c0_i32_15 : i32
      scf.if %30 {
        %c0_16 = arith.constant 0 : index
        %c0_17 = arith.constant 0 : index
        %31 = vector.load %arg10[%c0_16, %c0_17] : memref<128x128xf32, #tpu.memory_space<vmem>>, vector<128x128xf32>
        %c128_i32_18 = arith.constant 128 : i32
        %32 = arith.muli %arg1, %c128_i32_18 : i32
        %33 = tpu.assume_multiple %32, 128 : i32
        %34 = arith.truncf %31 : vector<128x128xf32> to vector<128x128xbf16>
        %35 = arith.index_cast %33 : i32 to index
        %c0_19 = arith.constant 0 : index
        %36 = vector.load %arg11[%35, %c0_19] : memref<128x128xbf16, #tpu.memory_space<vmem>>, vector<128x128xbf16>
        tpu.vector_store %arg11[%35, %c0_19], %34 {strides = array<i32>} : memref<128x128xbf16, #tpu.memory_space<vmem>>, vector<128x128xbf16>,
        %c0_20 = arith.constant 0 : index
        %c0_21 = arith.constant 0 : index
        %37 = vector.load %arg12[%c0_20, %c0_21] : memref<1x128xf32, #tpu.memory_space<vmem>>, vector<1x128xf32>
        %cst_22 = arith.constant dense<0.000000e+00> : vector<128xf32>
        %38 = vector.multi_reduction <add>, %31, %cst_22 [0] : vector<128x128xf32> to vector<128xf32>
        %39 = vector.shape_cast %38 : vector<128xf32> to vector<1x128xf32>
        %40 = arith.addf %37, %39 : vector<1x128xf32>
        %c0_23 = arith.constant 0 : index
        %c0_24 = arith.constant 0 : index
        %41 = vector.load %arg12[%c0_23, %c0_24] : memref<1x128xf32, #tpu.memory_space<vmem>>, vector<1x128xf32>
        tpu.vector_store %arg12[%c0_23, %c0_24], %40 {strides = array<i32>} : memref<1x128xf32, #tpu.memory_space<vmem>>, vector<1x128xf32>,
        %c0_25 = arith.constant 0 : index
        %c0_26 = arith.constant 0 : index
        %42 = vector.load %arg13[%c0_25, %c0_26] : memref<1x128xf32, #tpu.memory_space<vmem>>, vector<1x128xf32>
        %43 = arith.mulf %31, %31 : vector<128x128xf32>
        %cst_27 = arith.constant dense<0.000000e+00> : vector<128xf32>
        %44 = vector.multi_reduction <add>, %43, %cst_27 [0] : vector<128x128xf32> to vector<128xf32>
        %45 = vector.shape_cast %44 : vector<128xf32> to vector<1x128xf32>
        %46 = arith.addf %42, %45 : vector<1x128xf32>
        %c0_28 = arith.constant 0 : index
        %c0_29 = arith.constant 0 : index
        %47 = vector.load %arg13[%c0_28, %c0_29] : memref<1x128xf32, #tpu.memory_space<vmem>>, vector<1x128xf32>
        tpu.vector_store %arg13[%c0_28, %c0_29], %46 {strides = array<i32>} : memref<1x128xf32, #tpu.memory_space<vmem>>, vector<1x128xf32>,
      } else {
      }
    } else {
    }
    %c1_i32 = arith.constant 1 : i32
    %13 = arith.cmpi eq, %arg0, %c1_i32 : i32
    %14 = arith.extui %13 : i1 to i32
    %c0_i32_7 = arith.constant 0 : i32
    %15 = arith.cmpi ne, %14, %c0_i32_7 : i32
    scf.if %15 {
      %c128_i32 = arith.constant 128 : i32
      %16 = arith.muli %arg2, %c128_i32 : i32
      %17 = tpu.assume_multiple %16, 128 : i32
      %c0_i32_8 = arith.constant 0 : i32
      %18 = arith.cmpi eq, %arg1, %c0_i32_8 : i32
      %19 = arith.extui %18 : i1 to i32
      %c0_i32_9 = arith.constant 0 : i32
      %20 = arith.cmpi ne, %19, %c0_i32_9 : i32
      scf.if %20 {
        %c0_i32_18 = arith.constant 0 : i32
        %37 = arith.cmpi eq, %arg2, %c0_i32_18 : i32
        %38 = arith.extui %37 : i1 to i32
        %c0_i32_19 = arith.constant 0 : i32
        %39 = arith.cmpi ne, %38, %c0_i32_19 : i32
        scf.if %39 {
          %c0_27 = arith.constant 0 : index
          %c0_28 = arith.constant 0 : index
          %54 = vector.load %arg12[%c0_27, %c0_28] : memref<1x128xf32, #tpu.memory_space<vmem>>, vector<1x128xf32>
          %cst_29 = arith.constant 6.250000e-02 : f32
          %55 = vector.broadcast %cst_29 : f32 to vector<1x128xf32>
          %56 = arith.mulf %54, %55 : vector<1x128xf32>
          %c0_30 = arith.constant 0 : index
          %c0_31 = arith.constant 0 : index
          %57 = vector.load %arg13[%c0_30, %c0_31] : memref<1x128xf32, #tpu.memory_space<vmem>>, vector<1x128xf32>
          %cst_32 = arith.constant 6.250000e-02 : f32
          %58 = vector.broadcast %cst_32 : f32 to vector<1x128xf32>
          %59 = arith.mulf %57, %58 : vector<1x128xf32>
          %60 = arith.mulf %56, %56 : vector<1x128xf32>
          %61 = arith.subf %59, %60 : vector<1x128xf32>
          %cst_33 = arith.constant 0.000000e+00 : f32
          %62 = vector.broadcast %cst_33 : f32 to vector<1x128xf32>
          %63 = arith.maximumf %61, %62 : vector<1x128xf32>
          %c0_34 = arith.constant 0 : index
          %c0_35 = arith.constant 0 : index
          %64 = vector.load %arg5[%c0_34, %c0_35] : memref<1x128xf32, #tpu.memory_space<vmem>>, vector<1x128xf32>
          %cst_36 = arith.constant 9.99999974E-6 : f32
          %65 = vector.broadcast %cst_36 : f32 to vector<1x128xf32>
          %66 = arith.addf %63, %65 : vector<1x128xf32>
          %67 = math.rsqrt %66 : vector<1x128xf32>
          %68 = arith.mulf %64, %67 : vector<1x128xf32>
          %c0_37 = arith.constant 0 : index
          %c0_38 = arith.constant 0 : index
          %69 = vector.load %arg14[%c0_37, %c0_38] : memref<1x128xf32, #tpu.memory_space<vmem>>, vector<1x128xf32>
          tpu.vector_store %arg14[%c0_37, %c0_38], %68 {strides = array<i32>} : memref<1x128xf32, #tpu.memory_space<vmem>>, vector<1x128xf32>,
          %c0_39 = arith.constant 0 : index
          %c0_40 = arith.constant 0 : index
          %70 = vector.load %arg6[%c0_39, %c0_40] : memref<1x128xf32, #tpu.memory_space<vmem>>, vector<1x128xf32>
          %71 = arith.mulf %56, %68 : vector<1x128xf32>
          %72 = arith.subf %70, %71 : vector<1x128xf32>
          %c0_41 = arith.constant 0 : index
          %c0_42 = arith.constant 0 : index
          %73 = vector.load %arg15[%c0_41, %c0_42] : memref<1x128xf32, #tpu.memory_space<vmem>>, vector<1x128xf32>
          tpu.vector_store %arg15[%c0_41, %c0_42], %72 {strides = array<i32>} : memref<1x128xf32, #tpu.memory_space<vmem>>, vector<1x128xf32>,
        } else {
        }
        %40 = arith.index_cast %17 : i32 to index
        %c0_20 = arith.constant 0 : index
        %41 = vector.load %arg11[%40, %c0_20] : memref<128x128xbf16, #tpu.memory_space<vmem>>, vector<128x128xbf16>
        %42 = arith.extf %41 : vector<128x128xbf16> to vector<128x128xf32>
        %c0_21 = arith.constant 0 : index
        %c0_22 = arith.constant 0 : index
        %43 = vector.load %arg14[%c0_21, %c0_22] : memref<1x128xf32, #tpu.memory_space<vmem>>, vector<1x128xf32>
        %44 = vector.broadcast %43 : vector<1x128xf32> to vector<128x128xf32>
        %45 = arith.mulf %42, %44 : vector<128x128xf32>
        %c0_23 = arith.constant 0 : index
        %c0_24 = arith.constant 0 : index
        %46 = vector.load %arg15[%c0_23, %c0_24] : memref<1x128xf32, #tpu.memory_space<vmem>>, vector<1x128xf32>
        %47 = vector.broadcast %46 : vector<1x128xf32> to vector<128x128xf32>
        %48 = arith.addf %45, %47 : vector<128x128xf32>
        %cst_25 = arith.constant 0.000000e+00 : f32
        %49 = vector.broadcast %cst_25 : f32 to vector<128x128xf32>
        %50 = arith.maximumf %48, %49 : vector<128x128xf32>
        %51 = arith.truncf %50 : vector<128x128xf32> to vector<128x128xbf16>
        %52 = arith.index_cast %17 : i32 to index
        %c0_26 = arith.constant 0 : index
        %53 = vector.load %arg11[%52, %c0_26] : memref<128x128xbf16, #tpu.memory_space<vmem>>, vector<128x128xbf16>
        tpu.vector_store %arg11[%52, %c0_26], %51 {strides = array<i32>} : memref<128x128xbf16, #tpu.memory_space<vmem>>, vector<128x128xbf16>,
      } else {
      }
      %c0 = arith.constant 0 : index
      %c0_10 = arith.constant 0 : index
      %21 = vector.load %arg10[%c0, %c0_10] : memref<128x128xf32, #tpu.memory_space<vmem>>, vector<128x128xf32>
      %c128_i32_11 = arith.constant 128 : i32
      %22 = arith.muli %arg1, %c128_i32_11 : i32
      %23 = tpu.assume_multiple %22, 128 : i32
      %c128_i32_12 = arith.constant 128 : i32
      %24 = arith.muli %arg2, %c128_i32_12 : i32
      %25 = tpu.assume_multiple %24, 128 : i32
      %26 = arith.index_cast %23 : i32 to index
      %27 = arith.index_cast %25 : i32 to index
      %28 = vector.load %arg3[%26, %27] : memref<128x128xbf16, #tpu.memory_space<vmem>>, vector<128x128xbf16>
      %29 = arith.index_cast %17 : i32 to index
      %c0_13 = arith.constant 0 : index
      %30 = vector.load %arg11[%29, %c0_13] : memref<128x128xbf16, #tpu.memory_space<vmem>>, vector<128x128xbf16>
      %cst = arith.constant dense<0.000000e+00> : vector<128x128xf32>
      %31 = tpu.matmul %28, %30, %cst {dimension_numbers = #tpu.dot_dimension_numbers<[1], [0], [0], [1], [0, 0, 1, 1], [], []>} : vector<128x128xbf16>, vector<128x128xbf16>, vector<128x128xf32> -> vector<128x128xf32>
      %32 = arith.addf %21, %31 : vector<128x128xf32>
      %c0_14 = arith.constant 0 : index
      %c0_15 = arith.constant 0 : index
      %33 = vector.load %arg10[%c0_14, %c0_15] : memref<128x128xf32, #tpu.memory_space<vmem>>, vector<128x128xf32>
      tpu.vector_store %arg10[%c0_14, %c0_15], %32 {strides = array<i32>} : memref<128x128xf32, #tpu.memory_space<vmem>>, vector<128x128xf32>,
      %c0_i32_16 = arith.constant 0 : i32
      %34 = arith.cmpi eq, %arg2, %c0_i32_16 : i32
      %35 = arith.extui %34 : i1 to i32
      %c0_i32_17 = arith.constant 0 : i32
      %36 = arith.cmpi ne, %35, %c0_i32_17 : i32
      scf.if %36 {
        %c0_18 = arith.constant 0 : index
        %c0_19 = arith.constant 0 : index
        %37 = vector.load %arg10[%c0_18, %c0_19] : memref<128x128xf32, #tpu.memory_space<vmem>>, vector<128x128xf32>
        %c0_20 = arith.constant 0 : index
        %c0_21 = arith.constant 0 : index
        %38 = vector.load %arg7[%c0_20, %c0_21] : memref<128x128xf32, #tpu.memory_space<vmem>>, vector<128x128xf32>
        %cst_22 = arith.constant dense<0.000000e+00> : vector<128x128xf32>
        %39 = tpu.matmul %37, %38, %cst_22 {dimension_numbers = #tpu.dot_dimension_numbers<[1], [0], [0], [1], [0, 0, 1, 1], [], []>} : vector<128x128xf32>, vector<128x128xf32>, vector<128x128xf32> -> vector<128x128xf32>
        %c0_23 = arith.constant 0 : index
        %c0_24 = arith.constant 0 : index
        %40 = vector.load %arg8[%c0_23, %c0_24] : memref<1x128xf32, #tpu.memory_space<vmem>>, vector<1x128xf32>
        %41 = vector.broadcast %40 : vector<1x128xf32> to vector<128x128xf32>
        %42 = arith.addf %39, %41 : vector<128x128xf32>
        %c0_25 = arith.constant 0 : index
        %c0_26 = arith.constant 0 : index
        %43 = vector.load %arg9[%c0_25, %c0_26] : memref<128x128xf32, #tpu.memory_space<vmem>>, vector<128x128xf32>
        tpu.vector_store %arg9[%c0_25, %c0_26], %42 {strides = array<i32>} : memref<128x128xf32, #tpu.memory_space<vmem>>, vector<128x128xf32>,
      } else {
      }
    } else {
    }
    return
  }
  func.func @transform_0(%arg0: i32, %arg1: i32, %arg2: i32) -> (i32, i32) {
    %c0_i32 = arith.constant 0 : i32
    %c0_i32_0 = arith.constant 0 : i32
    %c0_i32_1 = arith.constant 0 : i32
    return %c0_i32, %c0_i32_0 : i32, i32
  }
  func.func @transform_1(%arg0: i32, %arg1: i32, %arg2: i32) -> (i32, i32) {
    %c1_i32 = arith.constant 1 : i32
    %0 = arith.subi %c1_i32, %arg0 : i32
    %1 = arith.muli %arg2, %0 : i32
    %c0_i32 = arith.constant 0 : i32
    %c0_i32_0 = arith.constant 0 : i32
    return %1, %c0_i32 : i32, i32
  }
  func.func @transform_2(%arg0: i32, %arg1: i32, %arg2: i32) -> (i32, i32) {
    %c0_i32 = arith.constant 0 : i32
    %c0_i32_0 = arith.constant 0 : i32
    %c0_i32_1 = arith.constant 0 : i32
    return %c0_i32, %c0_i32_0 : i32, i32
  }
  func.func @transform_3(%arg0: i32, %arg1: i32, %arg2: i32) -> (i32, i32) {
    %c0_i32 = arith.constant 0 : i32
    %c0_i32_0 = arith.constant 0 : i32
    %c0_i32_1 = arith.constant 0 : i32
    return %c0_i32, %c0_i32_0 : i32, i32
  }
  func.func @transform_4(%arg0: i32, %arg1: i32, %arg2: i32) -> (i32, i32) {
    %c0_i32 = arith.constant 0 : i32
    %c0_i32_0 = arith.constant 0 : i32
    %c0_i32_1 = arith.constant 0 : i32
    return %c0_i32, %c0_i32_0 : i32, i32
  }
  func.func @transform_5(%arg0: i32, %arg1: i32, %arg2: i32) -> (i32, i32) {
    %c0_i32 = arith.constant 0 : i32
    %c0_i32_0 = arith.constant 0 : i32
    %c0_i32_1 = arith.constant 0 : i32
    return %c0_i32, %c0_i32_0 : i32, i32
  }
  func.func @transform_6(%arg0: i32, %arg1: i32, %arg2: i32) -> (i32, i32) {
    %0 = arith.muli %arg1, %arg0 : i32
    %c0_i32 = arith.constant 0 : i32
    %c0_i32_0 = arith.constant 0 : i32
    return %0, %c0_i32 : i32, i32
  }
}

</mosaic_0001>

<llo_original>
// kernel: gcn_forward.1
$region0: #{gcn_forward.1}
  #allocation0 [shape = 'u32[]', space=smem, size = 0x4, offset = 0x4, fixed_abs, tag = 'smem constant byte address 0x4 - core index']
  #allocation1 [shape = 'u32[72,128]{1,0:T(1,128)}', space=vmem, size = 0x9000, scoped, tag = 'internal scratch']
  #allocation2 [shape = 'f32[128,128]{1,0:T(8,128)}', space=vmem, size = 0x10000, scoped, tag = 'scratch operand']
  #allocation3 [shape = 'bf16[128,128]{1,0:T(8,128)(2,1)}', space=vmem, size = 0x8000, scoped, tag = 'scratch operand']
  #allocation4 [shape = 'f32[1,128]{1,0:T(1,128)}', space=vmem, size = 0x200, scoped, tag = 'scratch operand']
  #allocation5 [shape = 'f32[1,128]{1,0:T(1,128)}', space=vmem, size = 0x200, scoped, tag = 'scratch operand']
  #allocation6 [shape = 'f32[1,128]{1,0:T(1,128)}', space=vmem, size = 0x200, scoped, tag = 'scratch operand']
  #allocation7 [shape = 'f32[1,128]{1,0:T(1,128)}', space=vmem, size = 0x200, scoped, tag = 'scratch operand']
  %s0 = inlined_call_operand.vmem [shape: bf16[128,128], index: 0, kind: input, shape index: {}]
  %s1 = inlined_call_operand.vmem [shape: bf16[128,128], index: 1, kind: input, shape index: {}]
  %s2 = inlined_call_operand.vmem [shape: f32[1,128], index: 2, kind: input, shape index: {}]
  %s3 = inlined_call_operand.vmem [shape: f32[1,128], index: 3, kind: input, shape index: {}]
  %s4 = inlined_call_operand.vmem [shape: f32[128,128], index: 4, kind: input, shape index: {}]
  %s5 = inlined_call_operand.vmem [shape: f32[1,128], index: 5, kind: input, shape index: {}]
  %s6 = inlined_call_operand.vmem [shape: f32[128,128], index: 6, kind: output, shape index: {}]
  %s7 = sld [smem:[#allocation0]]
  $region89: #{gcn_forward.1} parent=0
    _
  %s9 = ssub.s32 1, %s7
  %s10 = scalar_select 0, %s9, %s7
  loop: start=0, step=1, limit=4
  $region2: #{gcn_forward.1} parent=0 // loop_pre_header
    _
  $region3: #{gcn_forward.1} parent=0 // loop_header
    %s12 = sphi 0, %s16
    %p13 = scmp.ge.s32.totalorder %s12, 4
    %s19 = sphi 0, %s38
    %s20 = sphi 0, %s34
    %s21 = sphi 0, %s30
    %s22 = sphi 0, %s19
    %s23 = sphi 0, %s20
    %s24 = sphi 0, %s21
    %s25 = sphi 0, %s22
    %s26 = sphi 0, %s23
    %s27 = sphi 0, %s24
    %s39 = sphi 0, %s39
    %s41 = sphi 0, %s39
    %s42 = sphi 0, %s41
    %s56 = sphi 0, %s42
    %s66 = sphi 0, %s68
    %s69 = sphi 0, %s66
    %s70 = sphi 0, %s69
    %s86 = sphi 0, %s70
    %s90 = sphi 0, %s90
    %s92 = sphi 0, %s90
    %s93 = sphi 0, %s92
    %s107 = sphi 0, %s93
    %s111 = sphi 0, %s111
    %s113 = sphi 0, %s111
    %s114 = sphi 0, %s113
    %s128 = sphi 0, %s114
    %s132 = sphi 0, %s132
    %s134 = sphi 0, %s132
    %s135 = sphi 0, %s134
    %s149 = sphi 0, %s135
    %s153 = sphi 0, %s153
    %s155 = sphi 0, %s153
    %s156 = sphi 0, %s155
    %s170 = sphi 0, %s156
    %s178 = sphi 0, %s180
    %s181 = sphi 0, %s178
    %s182 = sphi 0, %s181
    %s198 = sphi 0, %s182
  $region4: #{gcn_forward.1} parent=0 // loop_header_branch
    %15 = sbr.rel (%p13) target = $region8
  $region5: #{gcn_forward.1} parent=0 // loop_body
    %s17 = ssub.s32 %s12, 1
    %s18 = ssub.s32 %s12, 2
    %s28 = sadd.s32 1, %s21
    %p29 = scmp.ge.s32.totalorder %s28, 1
    %s30 = scalar_select %p29, 0, %s28
    %s31 = sadd.s32 1, %s20
    %s32 = scalar_select %p29, %s31, %s20
    %p33 = scmp.ge.s32.totalorder %s32, 1
    %s34 = scalar_select %p33, 0, %s32
    %s35 = sadd.s32 1, %s19
    %s36 = scalar_select %p33, %s35, %s19
    %p37 = scmp.ge.s32.totalorder %s36, 2
    %s38 = scalar_select %p37, 0, %s36
    %s40 = sadd.s32 %s39, 1
    %p43 = scmp.eq.s32.totalorder %s12, 1
    %p44 = scmp.ne.s32.totalorder %s39, %s41
    %p45 = scmp.eq.s32.totalorder %s12, 0
    %p46 = por %p44, %p45
    %p47 = scmp.ne.s32.totalorder %s39, %s41
    %p48 = scmp.eq.s32.totalorder %s17, 1
    %p49 = por %p47, %p48
    %p50 = scmp.ne.s32.totalorder %s41, %s42
    %p51 = scmp.eq.s32.totalorder %s17, 0
    %p52 = por %p50, %p51
    %p53 = scmp.ne.s32.totalorder %s41, %s42
    %p54 = scmp.eq.s32.totalorder %s18, 1
    %p55 = por %p53, %p54
    %p57 = scmp.ne.s32.totalorder %s42, %s56
    %p58 = scmp.eq.s32.totalorder %s18, 0
    %p59 = por %p57, %p58
    %s60 = ssub.s32 1, %s19
    %s61 = smul.u32 %s21, %s60
    %s62 = ssub.s32 1, %s38
    %s63 = smul.u32 %s30, %s62
    %s64 = ssub.s32 %s61, %s63
    %p65 = scmp.eq.s32.totalorder %s64, 0
    %s67 = sadd.s32 %s66, 1
    %s68 = scalar_select %p65, %s66, %s67
    %p71 = pneg %p65
    %p72 = scmp.eq.s32.totalorder %s12, 1
    %p73 = por %p71, %p72
    %p74 = scmp.ne.s32.totalorder %s66, %s69
    %p75 = scmp.eq.s32.totalorder %s12, 0
    %p76 = por %p74, %p75
    %p77 = scmp.ne.s32.totalorder %s66, %s69
    %p78 = scmp.eq.s32.totalorder %s17, 1
    %p79 = por %p77, %p78
    %p80 = scmp.ne.s32.totalorder %s69, %s70
    %p81 = scmp.eq.s32.totalorder %s17, 0
    %p82 = por %p80, %p81
    %p83 = scmp.ne.s32.totalorder %s69, %s70
    %p84 = scmp.eq.s32.totalorder %s18, 1
    %p85 = por %p83, %p84
    %p87 = scmp.ne.s32.totalorder %s70, %s86
    %p88 = scmp.eq.s32.totalorder %s18, 0
    %p89 = por %p87, %p88
    %s91 = sadd.s32 %s90, 1
    %p94 = scmp.eq.s32.totalorder %s12, 1
    %p95 = scmp.ne.s32.totalorder %s90, %s92
    %p96 = scmp.eq.s32.totalorder %s12, 0
    %p97 = por %p95, %p96
    %p98 = scmp.ne.s32.totalorder %s90, %s92
    %p99 = scmp.eq.s32.totalorder %s17, 1
    %p100 = por %p98, %p99
    %p101 = scmp.ne.s32.totalorder %s92, %s93
    %p102 = scmp.eq.s32.totalorder %s17, 0
    %p103 = por %p101, %p102
    %p104 = scmp.ne.s32.totalorder %s92, %s93
    %p105 = scmp.eq.s32.totalorder %s18, 1
    %p106 = por %p104, %p105
    %p108 = scmp.ne.s32.totalorder %s93, %s107
    %p109 = scmp.eq.s32.totalorder %s18, 0
    %p110 = por %p108, %p109
    %s112 = sadd.s32 %s111, 1
    %p115 = scmp.eq.s32.totalorder %s12, 1
    %p116 = scmp.ne.s32.totalorder %s111, %s113
    %p117 = scmp.eq.s32.totalorder %s12, 0
    %p118 = por %p116, %p117
    %p119 = scmp.ne.s32.totalorder %s111, %s113
    %p120 = scmp.eq.s32.totalorder %s17, 1
    %p121 = por %p119, %p120
    %p122 = scmp.ne.s32.totalorder %s113, %s114
    %p123 = scmp.eq.s32.totalorder %s17, 0
    %p124 = por %p122, %p123
    %p125 = scmp.ne.s32.totalorder %s113, %s114
    %p126 = scmp.eq.s32.totalorder %s18, 1
    %p127 = por %p125, %p126
    %p129 = scmp.ne.s32.totalorder %s114, %s128
    %p130 = scmp.eq.s32.totalorder %s18, 0
    %p131 = por %p129, %p130
    %s133 = sadd.s32 %s132, 1
    %p136 = scmp.eq.s32.totalorder %s12, 1
    %p137 = scmp.ne.s32.totalorder %s132, %s134
    %p138 = scmp.eq.s32.totalorder %s12, 0
    %p139 = por %p137, %p138
    %p140 = scmp.ne.s32.totalorder %s132, %s134
    %p141 = scmp.eq.s32.totalorder %s17, 1
    %p142 = por %p140, %p141
    %p143 = scmp.ne.s32.totalorder %s134, %s135
    %p144 = scmp.eq.s32.totalorder %s17, 0
    %p145 = por %p143, %p144
    %p146 = scmp.ne.s32.totalorder %s134, %s135
    %p147 = scmp.eq.s32.totalorder %s18, 1
    %p148 = por %p146, %p147
    %p150 = scmp.ne.s32.totalorder %s135, %s149
    %p151 = scmp.eq.s32.totalorder %s18, 0
    %p152 = por %p150, %p151
    %s154 = sadd.s32 %s153, 1
    %p157 = scmp.eq.s32.totalorder %s12, 1
    %p158 = scmp.ne.s32.totalorder %s153, %s155
    %p159 = scmp.eq.s32.totalorder %s12, 0
    %p160 = por %p158, %p159
    %p161 = scmp.ne.s32.totalorder %s153, %s155
    %p162 = scmp.eq.s32.totalorder %s17, 1
    %p163 = por %p161, %p162
    %p164 = scmp.ne.s32.totalorder %s155, %s156
    %p165 = scmp.eq.s32.totalorder %s17, 0
    %p166 = por %p164, %p165
    %p167 = scmp.ne.s32.totalorder %s155, %s156
    %p168 = scmp.eq.s32.totalorder %s18, 1
    %p169 = por %p167, %p168
    %p171 = scmp.ne.s32.totalorder %s156, %s170
    %p172 = scmp.eq.s32.totalorder %s18, 0
    %p173 = por %p171, %p172
    %s174 = smul.u32 %s20, %s19
    %s175 = smul.u32 %s34, %s38
    %s176 = ssub.s32 %s174, %s175
    %p177 = scmp.eq.s32.totalorder %s176, 0
    %s179 = sadd.s32 %s178, 1
    %s180 = scalar_select %p177, %s178, %s179
    %p183 = pneg %p177
    %p184 = scmp.eq.s32.totalorder %s12, 1
    %p185 = por %p183, %p184
    %p186 = scmp.ne.s32.totalorder %s178, %s181
    %p187 = scmp.eq.s32.totalorder %s12, 0
    %p188 = por %p186, %p187
    %p189 = scmp.ne.s32.totalorder %s178, %s181
    %p190 = scmp.eq.s32.totalorder %s17, 1
    %p191 = por %p189, %p190
    %p192 = scmp.ne.s32.totalorder %s181, %s182
    %p193 = scmp.eq.s32.totalorder %s17, 0
    %p194 = por %p192, %p193
    %p195 = scmp.ne.s32.totalorder %s181, %s182
    %p196 = scmp.eq.s32.totalorder %s18, 1
    %p197 = por %p195, %p196
    %p199 = scmp.ne.s32.totalorder %s182, %s198
    %p200 = scmp.eq.s32.totalorder %s18, 0
    %p201 = por %p199, %p200
    %p202 = scmp.le.s32.totalorder 1, %s12
    %p203 = scmp.lt.s32.totalorder %s12, 3
    %p204 = pnand %p202, %p203
    %p205 = pneg %p204
    // Predicated region
    $region9: #{gcn_forward.1} parent=5 // pred_check
      _
    $region10: #{gcn_forward.1} parent=5 // pred_check_branch
      %207 = sbr.rel (%p204) target = $region12
    $region11: #{gcn_forward.1} parent=5 // pred_region
      %s208 = ssub.s32 %s12, 1
      // Predicated region
      $region13: #{gcn_forward.1} parent=11 // pred_check
        %p209 = pneg %p52
      $region14: #{gcn_forward.1} parent=11 // pred_check_branch
        %211 = sbr.rel (%p209) target = $region16
      $region15: #{gcn_forward.1} parent=11 // pred_region
        _
      $region16: #{gcn_forward.1} parent=11 // pred_fallthru
        _
      // Predicated region
      $region17: #{gcn_forward.1} parent=11 // pred_check
        %p212 = pneg %p103
      $region18: #{gcn_forward.1} parent=11 // pred_check_branch
        %214 = sbr.rel (%p212) target = $region20
      $region19: #{gcn_forward.1} parent=11 // pred_region
        _
      $region20: #{gcn_forward.1} parent=11 // pred_fallthru
        _
      // Predicated region
      $region21: #{gcn_forward.1} parent=11 // pred_check
        %p215 = pneg %p124
      $region22: #{gcn_forward.1} parent=11 // pred_check_branch
        %217 = sbr.rel (%p215) target = $region24
      $region23: #{gcn_forward.1} parent=11 // pred_region
        _
      $region24: #{gcn_forward.1} parent=11 // pred_fallthru
        _
      // Predicated region
      $region25: #{gcn_forward.1} parent=11 // pred_check
        %p218 = pneg %p145
      $region26: #{gcn_forward.1} parent=11 // pred_check_branch
        %220 = sbr.rel (%p218) target = $region28
      $region27: #{gcn_forward.1} parent=11 // pred_region
        _
      $region28: #{gcn_forward.1} parent=11 // pred_fallthru
        _
      // Predicated region
      $region29: #{gcn_forward.1} parent=11 // pred_check
        %p221 = pneg %p166
      $region30: #{gcn_forward.1} parent=11 // pred_check_branch
        %223 = sbr.rel (%p221) target = $region32
      $region31: #{gcn_forward.1} parent=11 // pred_region
        _
      $region32: #{gcn_forward.1} parent=11 // pred_fallthru
        _
    $region12: #{gcn_forward.1} parent=5 // pred_fallthru
      _
    %p224 = scmp.lt.s32.totalorder %s12, 2
    // Predicated region
    $region33: #{gcn_forward.1} parent=5 // pred_check
      %p225 = pneg %p224
    $region34: #{gcn_forward.1} parent=5 // pred_check_branch
      %227 = sbr.rel (%p225) target = $region36
    $region35: #{gcn_forward.1} parent=5 // pred_region
      // Predicated region
      $region37: #{gcn_forward.1} parent=35 // pred_check
        %p228 = pneg %p76
      $region38: #{gcn_forward.1} parent=35 // pred_check_branch
        %230 = sbr.rel (%p228) target = $region40
      $region39: #{gcn_forward.1} parent=35 // pred_region
        %s231 = ssub.s32 1, %s19
        %s232 = smul.u32 %s21, %s231
        %s233 = smul.u32 16, %s232
        %p234 = scmp.lt.s32.totalorder %s233, 15
        %s235 = scalar_select %p234, %s233, 15
        %s236 = smul.addr %s235, 4
        %s237 = scalar_lea.vmem %s1, %s236
        %s238 = ssub.s32 1, %s19
        %s239 = smul.u32 %s21, %s238
        %s240 = smul.u32 16, %s239
      $region40: #{gcn_forward.1} parent=35 // pred_fallthru
        _
    $region36: #{gcn_forward.1} parent=5 // pred_fallthru
      _
    %p241 = scmp.le.s32.totalorder 1, %s12
    %p242 = scmp.lt.s32.totalorder %s12, 3
    %p243 = pnand %p241, %p242
    %p244 = pneg %p243
    // Predicated region
    $region41: #{gcn_forward.1} parent=5 // pred_check
      _
    $region42: #{gcn_forward.1} parent=5 // pred_check_branch
      %246 = sbr.rel (%p243) target = $region44
    $region43: #{gcn_forward.1} parent=5 // pred_region
      %s247 = ssub.s32 %s12, 1
      %p248 = pneg %p52
      %p249 = pneg %p49
      %s250 = ssub.s32 1, %s22
      %s251 = smul.u32 %s24, %s250
      %s252 = smul.u32 16, %s251
      %p253 = scmp.lt.s32.totalorder %s252, 15
      %s254 = scalar_select %p253, %s252, 15
      %s255 = smul.addr %s254, 4
      %s256 = scalar_lea.vmem %s1, %s255
      %p257 = pneg %p82
      %p258 = pneg %p79
      %p259 = pneg %p103
      %p260 = pneg %p100
      %p261 = pneg %p124
      %p262 = pneg %p121
      %p263 = pneg %p145
      %p264 = pneg %p142
      %p265 = pneg %p166
      %p266 = pneg %p163
      %p267 = pneg %p194
      %p268 = pneg %p191
      %s269 = smul.u32 %s23, %s22
      %s270 = smul.u32 16, %s269
      %p271 = scmp.lt.s32.totalorder %s270, 15
      %s272 = scalar_select %p271, %s270, 15
      %s273 = smul.addr %s272, 8
      %s274 = scalar_lea.vmem %s6, %s273
      %s275 = ssub.s32 1, %s22
      %s276 = smul.u32 %s24, %s275
      %s277 = smul.u32 16, %s276
      %p278 = scmp.lt.s32.totalorder %s277, 15
      %s279 = scalar_select %p278, %s277, 15
      %s280 = smul.addr %s279, 4
      %s281 = scalar_lea.vmem %s1, %s280
      %s282 = ssub.s32 1, %s22
      %s283 = smul.u32 %s24, %s282
      %s284 = smul.u32 16, %s283
      %s285 = smul.u32 %s23, %s22
      %s286 = smul.u32 16, %s285
      %p287 = scmp.lt.s32.totalorder %s286, 15
      %s288 = scalar_select %p287, %s286, 15
      %s289 = smul.addr %s288, 8
      %s290 = scalar_lea.vmem %s6, %s289
      %s291 = smul.u32 %s23, %s22
      %s292 = smul.u32 16, %s291
      %p293 = scmp.eq.s32.totalorder %s24, 0
      // Predicated region
      $region45: #{gcn_forward.1} parent=43 // pred_check
        %p294 = pneg %p293
      $region46: #{gcn_forward.1} parent=43 // pred_check_branch
        %296 = sbr.rel (%p294) target = $region48
      $region47: #{gcn_forward.1} parent=43 // pred_region
        %297 = vst [vmem:[#allocation2] sm:$0xff] 0.0
        %298 = vst [vmem:[#allocation2 + $0x8] sm:$0xff] 0.0
        %299 = vst [vmem:[#allocation2 + $0x10] sm:$0xff] 0.0
        %300 = vst [vmem:[#allocation2 + $0x18] sm:$0xff] 0.0
        %301 = vst [vmem:[#allocation2 + $0x20] sm:$0xff] 0.0
        %302 = vst [vmem:[#allocation2 + $0x28] sm:$0xff] 0.0
        %303 = vst [vmem:[#allocation2 + $0x30] sm:$0xff] 0.0
        %304 = vst [vmem:[#allocation2 + $0x38] sm:$0xff] 0.0
        %305 = vst [vmem:[#allocation2 + $0x40] sm:$0xff] 0.0
        %306 = vst [vmem:[#allocation2 + $0x48] sm:$0xff] 0.0
        %307 = vst [vmem:[#allocation2 + $0x50] sm:$0xff] 0.0
        %308 = vst [vmem:[#allocation2 + $0x58] sm:$0xff] 0.0
        %309 = vst [vmem:[#allocation2 + $0x60] sm:$0xff] 0.0
        %310 = vst [vmem:[#allocation2 + $0x68] sm:$0xff] 0.0
        %311 = vst [vmem:[#allocation2 + $0x70] sm:$0xff] 0.0
        %312 = vst [vmem:[#allocation2 + $0x78] sm:$0xff] 0.0
      $region48: #{gcn_forward.1} parent=43 // pred_fallthru
        _
      %p313 = scmp.eq.s32.totalorder %s22, 0
      %p314 = scmp.eq.s32.totalorder %s23, 0
      %p315 = pnand %p313, %p314
      %p316 = pneg %p315
      %p317 = pnand %p316, %p293
      %p318 = pneg %p317
      // Predicated region
      $region49: #{gcn_forward.1} parent=43 // pred_check
        _
      $region50: #{gcn_forward.1} parent=43 // pred_check_branch
        %320 = sbr.rel (%p317) target = $region52
      $region51: #{gcn_forward.1} parent=43 // pred_region
        %321 = vst [vmem:[#allocation4] sm:$0x1] 0.0
        %322 = vst [vmem:[#allocation5] sm:$0x1] 0.0
      $region52: #{gcn_forward.1} parent=43 // pred_fallthru
        _
      // Predicated region
      $region53: #{gcn_forward.1} parent=43 // pred_check
        %p323 = pneg %p313
      $region54: #{gcn_forward.1} parent=43 // pred_check_branch
        %325 = sbr.rel (%p323) target = $region56
      $region55: #{gcn_forward.1} parent=43 // pred_region
        %v326 = vld [vmem:[#allocation2] sm:$0xff]
        %v327 = vld [vmem:[#allocation2 + $0x8] sm:$0xff]
        %v328 = vld [vmem:[#allocation2 + $0x10] sm:$0xff]
        %v329 = vld [vmem:[#allocation2 + $0x18] sm:$0xff]
        %v330 = vld [vmem:[#allocation2 + $0x20] sm:$0xff]
        %v331 = vld [vmem:[#allocation2 + $0x28] sm:$0xff]
        %v332 = vld [vmem:[#allocation2 + $0x30] sm:$0xff]
        %v333 = vld [vmem:[#allocation2 + $0x38] sm:$0xff]
        %v334 = vld [vmem:[#allocation2 + $0x40] sm:$0xff]
        %v335 = vld [vmem:[#allocation2 + $0x48] sm:$0xff]
        %v336 = vld [vmem:[#allocation2 + $0x50] sm:$0xff]
        %v337 = vld [vmem:[#allocation2 + $0x58] sm:$0xff]
        %v338 = vld [vmem:[#allocation2 + $0x60] sm:$0xff]
        %v339 = vld [vmem:[#allocation2 + $0x68] sm:$0xff]
        %v340 = vld [vmem:[#allocation2 + $0x70] sm:$0xff]
        %v341 = vld [vmem:[#allocation2 + $0x78] sm:$0xff]
        %s342 = smul.u32 %s23, 128
        %s343 = smul.u32 %s24, 128
        %s344 = sshra.s32 %s343, 7
        %s345 = sand.u32 %s343, 127
        %s346 = sshra.s32 %s342, 3
        %s347 = sand.u32 %s342, 7
        %s348 = sadd.s32 %s344, %s346
        %s349 = smul.addr %s348, 4
        %s350 = scalar_lea.vmem %s0, %s349
        %v351 = vld [vmem:[%s350] sm:$0xf]
        %v352 = vld [vmem:[%s350 + $0x4] sm:$0xf]
        %v353 = vld [vmem:[%s350 + $0x8] sm:$0xf]
        %v354 = vld [vmem:[%s350 + $0xc] sm:$0xf]
        %v355 = vld [vmem:[%s350 + $0x10] sm:$0xf]
        %v356 = vld [vmem:[%s350 + $0x14] sm:$0xf]
        %v357 = vld [vmem:[%s350 + $0x18] sm:$0xf]
        %v358 = vld [vmem:[%s350 + $0x1c] sm:$0xf]
        %v359 = vld [vmem:[%s350 + $0x20] sm:$0xf]
        %v360 = vld [vmem:[%s350 + $0x24] sm:$0xf]
        %v361 = vld [vmem:[%s350 + $0x28] sm:$0xf]
        %v362 = vld [vmem:[%s350 + $0x2c] sm:$0xf]
        %v363 = vld [vmem:[%s350 + $0x30] sm:$0xf]
        %v364 = vld [vmem:[%s350 + $0x34] sm:$0xf]
        %v365 = vld [vmem:[%s350 + $0x38] sm:$0xf]
        %v366 = vld [vmem:[%s350 + $0x3c] sm:$0xf]
        %v367 = vld [vmem:[%s281] sm:$0xf]
        %v368 = vld [vmem:[%s281 + $0x4] sm:$0xf]
        %v369 = vld [vmem:[%s281 + $0x8] sm:$0xf]
        %v370 = vld [vmem:[%s281 + $0xc] sm:$0xf]
        %v371 = vld [vmem:[%s281 + $0x10] sm:$0xf]
        %v372 = vld [vmem:[%s281 + $0x14] sm:$0xf]
        %v373 = vld [vmem:[%s281 + $0x18] sm:$0xf]
        %v374 = vld [vmem:[%s281 + $0x1c] sm:$0xf]
        %v375 = vld [vmem:[%s281 + $0x20] sm:$0xf]
        %v376 = vld [vmem:[%s281 + $0x24] sm:$0xf]
        %v377 = vld [vmem:[%s281 + $0x28] sm:$0xf]
        %v378 = vld [vmem:[%s281 + $0x2c] sm:$0xf]
        %v379 = vld [vmem:[%s281 + $0x30] sm:$0xf]
        %v380 = vld [vmem:[%s281 + $0x34] sm:$0xf]
        %v381 = vld [vmem:[%s281 + $0x38] sm:$0xf]
        %v382 = vld [vmem:[%s281 + $0x3c] sm:$0xf]
        %v399 = vunpack.c.l.b16 %v351
        %v400 = vunpack.c.l.b16 %v352
        %v401 = vunpack.c.l.b16 %v353
        %v402 = vunpack.c.l.b16 %v354
        %v403 = vunpack.c.l.b16 %v355
        %v404 = vunpack.c.l.b16 %v356
        %v405 = vunpack.c.l.b16 %v357
        %v406 = vunpack.c.l.b16 %v358
        %v407 = vunpack.c.l.b16 %v359
        %v408 = vunpack.c.l.b16 %v360
        %v409 = vunpack.c.l.b16 %v361
        %v410 = vunpack.c.l.b16 %v362
        %v411 = vunpack.c.l.b16 %v363
        %v412 = vunpack.c.l.b16 %v364
        %v413 = vunpack.c.l.b16 %v365
        %v414 = vunpack.c.l.b16 %v366
        %v415 = vpack.c.b16 %v400, %v399
        %v416 = vpack.c.b16 %v402, %v401
        %v417 = vpack.c.b16 %v404, %v403
        %v418 = vpack.c.b16 %v406, %v405
        %v419 = vpack.c.b16 %v408, %v407
        %v420 = vpack.c.b16 %v410, %v409
        %v421 = vpack.c.b16 %v412, %v411
        %v422 = vpack.c.b16 %v414, %v413
        %v447 = vunpack.c.l.b16 %v367
        %v448 = vunpack.c.l.b16 %v368
        %v449 = vunpack.c.l.b16 %v369
        %v450 = vunpack.c.l.b16 %v370
        %v451 = vunpack.c.l.b16 %v371
        %v452 = vunpack.c.l.b16 %v372
        %v453 = vunpack.c.l.b16 %v373
        %v454 = vunpack.c.l.b16 %v374
        %v455 = vunpack.c.l.b16 %v375
        %v456 = vunpack.c.l.b16 %v376
        %v457 = vunpack.c.l.b16 %v377
        %v458 = vunpack.c.l.b16 %v378
        %v459 = vunpack.c.l.b16 %v379
        %v460 = vunpack.c.l.b16 %v380
        %v461 = vunpack.c.l.b16 %v381
        %v462 = vunpack.c.l.b16 %v382
        %v463 = vpack.c.b16 %v448, %v447
        %v464 = vpack.c.b16 %v450, %v449
        %v465 = vpack.c.b16 %v452, %v451
        %v466 = vpack.c.b16 %v454, %v453
        %v467 = vpack.c.b16 %v456, %v455
        %v468 = vpack.c.b16 %v458, %v457
        %v469 = vpack.c.b16 %v460, %v459
        %v470 = vpack.c.b16 %v462, %v461
        %479 = vmatpush.bf16.msra.mxu0 %v470
        %480 = vmatpush.bf16.msra.mxu0 %v469
        %481 = vmatpush.bf16.msra.mxu0 %v468
        %482 = vmatpush.bf16.msra.mxu0 %v467
        %483 = vmatpush.bf16.msra.mxu0 %v466
        %484 = vmatpush.bf16.msra.mxu0 %v465
        %485 = vmatpush.bf16.msra.mxu0 %v464
        %486 = vmatpush.bf16.msra.mxu0 %v463
        %487 = vmatmul.bf16.gmra.mxu0 %v415
        %v488 = vpop.f32.mrf.mxu0
        %v489 = vadd.f32 0.0, %v488
        %v490 = vpop.f32.mrf.mxu0
        %v491 = vadd.f32 0.0, %v490
        %492 = vmatmul.bf16.gmra.mxu0 %v416
        %v493 = vpop.f32.mrf.mxu0
        %v494 = vadd.f32 0.0, %v493
        %v495 = vpop.f32.mrf.mxu0
        %v496 = vadd.f32 0.0, %v495
        %497 = vmatmul.bf16.gmra.mxu0 %v417
        %v498 = vpop.f32.mrf.mxu0
        %v499 = vadd.f32 0.0, %v498
        %v500 = vpop.f32.mrf.mxu0
        %v501 = vadd.f32 0.0, %v500
        %502 = vmatmul.bf16.gmra.mxu0 %v418
        %v503 = vpop.f32.mrf.mxu0
        %v504 = vadd.f32 0.0, %v503
        %v505 = vpop.f32.mrf.mxu0
        %v506 = vadd.f32 0.0, %v505
        %507 = vmatmul.bf16.gmra.mxu0 %v419
        %v508 = vpop.f32.mrf.mxu0
        %v509 = vadd.f32 0.0, %v508
        %v510 = vpop.f32.mrf.mxu0
        %v511 = vadd.f32 0.0, %v510
        %512 = vmatmul.bf16.gmra.mxu0 %v420
        %v513 = vpop.f32.mrf.mxu0
        %v514 = vadd.f32 0.0, %v513
        %v515 = vpop.f32.mrf.mxu0
        %v516 = vadd.f32 0.0, %v515
        %517 = vmatmul.bf16.gmra.mxu0 %v421
        %v518 = vpop.f32.mrf.mxu0
        %v519 = vadd.f32 0.0, %v518
        %v520 = vpop.f32.mrf.mxu0
        %v521 = vadd.f32 0.0, %v520
        %522 = vmatmul.bf16.gmra.mxu0 %v422
        %v523 = vpop.f32.mrf.mxu0
        %v524 = vadd.f32 0.0, %v523
        %v525 = vpop.f32.mrf.mxu0
        %v526 = vadd.f32 0.0, %v525
        %527 = vdwg.mxu0
        %v528 = vadd.f32 %v326, %v489
        %v529 = vadd.f32 %v327, %v491
        %v530 = vadd.f32 %v328, %v494
        %v531 = vadd.f32 %v329, %v496
        %v532 = vadd.f32 %v330, %v499
        %v533 = vadd.f32 %v331, %v501
        %v534 = vadd.f32 %v332, %v504
        %v535 = vadd.f32 %v333, %v506
        %v536 = vadd.f32 %v334, %v509
        %v537 = vadd.f32 %v335, %v511
        %v538 = vadd.f32 %v336, %v514
        %v539 = vadd.f32 %v337, %v516
        %v540 = vadd.f32 %v338, %v519
        %v541 = vadd.f32 %v339, %v521
        %v542 = vadd.f32 %v340, %v524
        %v543 = vadd.f32 %v341, %v526
        %544 = vst [vmem:[#allocation2] sm:$0xff] %v528
        %545 = vst [vmem:[#allocation2 + $0x8] sm:$0xff] %v529
        %546 = vst [vmem:[#allocation2 + $0x10] sm:$0xff] %v530
        %547 = vst [vmem:[#allocation2 + $0x18] sm:$0xff] %v531
        %548 = vst [vmem:[#allocation2 + $0x20] sm:$0xff] %v532
        %549 = vst [vmem:[#allocation2 + $0x28] sm:$0xff] %v533
        %550 = vst [vmem:[#allocation2 + $0x30] sm:$0xff] %v534
        %551 = vst [vmem:[#allocation2 + $0x38] sm:$0xff] %v535
        %552 = vst [vmem:[#allocation2 + $0x40] sm:$0xff] %v536
        %553 = vst [vmem:[#allocation2 + $0x48] sm:$0xff] %v537
        %554 = vst [vmem:[#allocation2 + $0x50] sm:$0xff] %v538
        %555 = vst [vmem:[#allocation2 + $0x58] sm:$0xff] %v539
        %556 = vst [vmem:[#allocation2 + $0x60] sm:$0xff] %v540
        %557 = vst [vmem:[#allocation2 + $0x68] sm:$0xff] %v541
        %558 = vst [vmem:[#allocation2 + $0x70] sm:$0xff] %v542
        %559 = vst [vmem:[#allocation2 + $0x78] sm:$0xff] %v543
        // Predicated region
        $region57: #{gcn_forward.1} parent=55 // pred_check
          %p560 = pneg %p293
        $region58: #{gcn_forward.1} parent=55 // pred_check_branch
          %562 = sbr.rel (%p560) target = $region60
        $region59: #{gcn_forward.1} parent=55 // pred_region
          %v563 = vld [vmem:[#allocation2] sm:$0xff]
          %v564 = vld [vmem:[#allocation2 + $0x8] sm:$0xff]
          %v565 = vld [vmem:[#allocation2 + $0x10] sm:$0xff]
          %v566 = vld [vmem:[#allocation2 + $0x18] sm:$0xff]
          %v567 = vld [vmem:[#allocation2 + $0x20] sm:$0xff]
          %v568 = vld [vmem:[#allocation2 + $0x28] sm:$0xff]
          %v569 = vld [vmem:[#allocation2 + $0x30] sm:$0xff]
          %v570 = vld [vmem:[#allocation2 + $0x38] sm:$0xff]
          %v571 = vld [vmem:[#allocation2 + $0x40] sm:$0xff]
          %v572 = vld [vmem:[#allocation2 + $0x48] sm:$0xff]
          %v573 = vld [vmem:[#allocation2 + $0x50] sm:$0xff]
          %v574 = vld [vmem:[#allocation2 + $0x58] sm:$0xff]
          %v575 = vld [vmem:[#allocation2 + $0x60] sm:$0xff]
          %v576 = vld [vmem:[#allocation2 + $0x68] sm:$0xff]
          %v577 = vld [vmem:[#allocation2 + $0x70] sm:$0xff]
          %v578 = vld [vmem:[#allocation2 + $0x78] sm:$0xff]
          %v579 = vpack.c.bf16 %v563, %v563
          %v580 = vpack.c.bf16 %v564, %v564
          %v581 = vpack.c.bf16 %v565, %v565
          %v582 = vpack.c.bf16 %v566, %v566
          %v583 = vpack.c.bf16 %v567, %v567
          %v584 = vpack.c.bf16 %v568, %v568
          %v585 = vpack.c.bf16 %v569, %v569
          %v586 = vpack.c.bf16 %v570, %v570
          %v587 = vpack.c.bf16 %v571, %v571
          %v588 = vpack.c.bf16 %v572, %v572
          %v589 = vpack.c.bf16 %v573, %v573
          %v590 = vpack.c.bf16 %v574, %v574
          %v591 = vpack.c.bf16 %v575, %v575
          %v592 = vpack.c.bf16 %v576, %v576
          %v593 = vpack.c.bf16 %v577, %v577
          %v594 = vpack.c.bf16 %v578, %v578
          %s595 = smul.addr %s346, 4
          %s596 = scalar_lea.vmem [#allocation3], %s595
          %597 = vst [vmem:[%s596] sm:$0xf] %v579
          %598 = vst [vmem:[%s596 + $0x4] sm:$0xf] %v580
          %599 = vst [vmem:[%s596 + $0x8] sm:$0xf] %v581
          %600 = vst [vmem:[%s596 + $0xc] sm:$0xf] %v582
          %601 = vst [vmem:[%s596 + $0x10] sm:$0xf] %v583
          %602 = vst [vmem:[%s596 + $0x14] sm:$0xf] %v584
          %603 = vst [vmem:[%s596 + $0x18] sm:$0xf] %v585
          %604 = vst [vmem:[%s596 + $0x1c] sm:$0xf] %v586
          %605 = vst [vmem:[%s596 + $0x20] sm:$0xf] %v587
          %606 = vst [vmem:[%s596 + $0x24] sm:$0xf] %v588
          %607 = vst [vmem:[%s596 + $0x28] sm:$0xf] %v589
          %608 = vst [vmem:[%s596 + $0x2c] sm:$0xf] %v590
          %609 = vst [vmem:[%s596 + $0x30] sm:$0xf] %v591
          %610 = vst [vmem:[%s596 + $0x34] sm:$0xf] %v592
          %611 = vst [vmem:[%s596 + $0x38] sm:$0xf] %v593
          %612 = vst [vmem:[%s596 + $0x3c] sm:$0xf] %v594
          %v613 = vld [vmem:[#allocation4] sm:$0x1]
          %v614 = vadd.f32 %v563, %v564
          %v615 = vadd.f32 %v614, %v565
          %v616 = vadd.f32 %v615, %v566
          %v617 = vadd.f32 %v616, %v567
          %v618 = vadd.f32 %v617, %v568
          %v619 = vadd.f32 %v618, %v569
          %v620 = vadd.f32 %v619, %v570
          %v621 = vadd.f32 %v620, %v571
          %v622 = vadd.f32 %v621, %v572
          %v623 = vadd.f32 %v622, %v573
          %v624 = vadd.f32 %v623, %v574
          %v625 = vadd.f32 %v624, %v575
          %v626 = vadd.f32 %v625, %v576
          %v627 = vadd.f32 %v626, %v577
          %v628 = vadd.f32 %v627, %v578
          %v629 = vrot.slane %v628, 4
          %v630 = vadd.f32 %v628, %v629
          %v631 = vrot.slane %v630, 2
          %v632 = vadd.f32 %v630, %v631
          %v633 = vrot.slane %v632, 1
          %v634 = vadd.f32 %v632, %v633
          %v635 = vadd.f32 %v613, %v634
          %636 = vst [vmem:[#allocation4] sm:$0x1] %v635
          %v637 = vld [vmem:[#allocation5] sm:$0x1]
          %v638 = vmul.f32 %v563, %v563
          %v639 = vmul.f32 %v564, %v564
          %v640 = vmul.f32 %v565, %v565
          %v641 = vmul.f32 %v566, %v566
          %v642 = vmul.f32 %v567, %v567
          %v643 = vmul.f32 %v568, %v568
          %v644 = vmul.f32 %v569, %v569
          %v645 = vmul.f32 %v570, %v570
          %v646 = vmul.f32 %v571, %v571
          %v647 = vmul.f32 %v572, %v572
          %v648 = vmul.f32 %v573, %v573
          %v649 = vmul.f32 %v574, %v574
          %v650 = vmul.f32 %v575, %v575
          %v651 = vmul.f32 %v576, %v576
          %v652 = vmul.f32 %v577, %v577
          %v653 = vmul.f32 %v578, %v578
          %v654 = vadd.f32 %v638, %v639
          %v655 = vadd.f32 %v654, %v640
          %v656 = vadd.f32 %v655, %v641
          %v657 = vadd.f32 %v656, %v642
          %v658 = vadd.f32 %v657, %v643
          %v659 = vadd.f32 %v658, %v644
          %v660 = vadd.f32 %v659, %v645
          %v661 = vadd.f32 %v660, %v646
          %v662 = vadd.f32 %v661, %v647
          %v663 = vadd.f32 %v662, %v648
          %v664 = vadd.f32 %v663, %v649
          %v665 = vadd.f32 %v664, %v650
          %v666 = vadd.f32 %v665, %v651
          %v667 = vadd.f32 %v666, %v652
          %v668 = vadd.f32 %v667, %v653
          %v669 = vrot.slane %v668, 4
          %v670 = vadd.f32 %v668, %v669
          %v671 = vrot.slane %v670, 2
          %v672 = vadd.f32 %v670, %v671
          %v673 = vrot.slane %v672, 1
          %v674 = vadd.f32 %v672, %v673
          %v675 = vadd.f32 %v637, %v674
          %676 = vst [vmem:[#allocation5] sm:$0x1] %v675
        $region60: #{gcn_forward.1} parent=55 // pred_fallthru
          _
      $region56: #{gcn_forward.1} parent=43 // pred_fallthru
        _
      %p677 = scmp.eq.s32.totalorder %s22, 1
      // Predicated region
      $region61: #{gcn_forward.1} parent=43 // pred_check
        %p678 = pneg %p677
      $region62: #{gcn_forward.1} parent=43 // pred_check_branch
        %680 = sbr.rel (%p678) target = $region64
      $region63: #{gcn_forward.1} parent=43 // pred_region
        %s681 = smul.u32 %s24, 128
        // Predicated region
        $region65: #{gcn_forward.1} parent=63 // pred_check
          %p682 = pneg %p314
        $region66: #{gcn_forward.1} parent=63 // pred_check_branch
          %684 = sbr.rel (%p682) target = $region68
        $region67: #{gcn_forward.1} parent=63 // pred_region
          // Predicated region
          $region69: #{gcn_forward.1} parent=67 // pred_check
            %p685 = pneg %p293
          $region70: #{gcn_forward.1} parent=67 // pred_check_branch
            %687 = sbr.rel (%p685) target = $region72
          $region71: #{gcn_forward.1} parent=67 // pred_region
            %v688 = vld [vmem:[#allocation4] sm:$0x1]
            %v689 = vmul.f32 %v688, 0.0625
            %v690 = vld [vmem:[#allocation5] sm:$0x1]
            %v691 = vmul.f32 %v690, 0.0625
            %v692 = vmul.f32 %v689, %v689
            %v693 = vsub.f32 %v691, %v692
            %v694 = vmax.f32 %v693, 0.0
            %v695 = vld [vmem:[%s2] sm:$0x1]
            %v696 = vadd.f32 %v694, 1e-05
            %v697 = vrsqrt.pop %v696
            %v698 = vmul.f32 %v697, %v696
            %v699 = vmul.f32 %v698, %v697
            %v700 = vmul.f32 0.5, %v699
            %v701 = vsub.f32 1.5, %v700
            %v702 = vmul.f32 %v697, %v701
            %vm703 = vweird.f32 %v696
            %vm704 = vweird.f32 %v697
            %vm705 = vmor %vm703, %vm704
            %v706 = vsel %vm705, %v697, %v702
            %v707 = vmul.f32 %v695, %v706
            %708 = vst [vmem:[#allocation6] sm:$0x1] %v707
            %v709 = vld [vmem:[%s3] sm:$0x1]
            %v710 = vmul.f32 %v689, %v707
            %v711 = vsub.f32 %v709, %v710
            %712 = vst [vmem:[#allocation7] sm:$0x1] %v711
          $region72: #{gcn_forward.1} parent=67 // pred_fallthru
            _
          %s713 = sshra.s32 %s681, 3
          %s714 = sand.u32 %s681, 7
          %s715 = smul.addr %s713, 4
          %s716 = scalar_lea.vmem [#allocation3], %s715
          %v717 = vld [vmem:[%s716] sm:$0xf]
          %v718 = vld [vmem:[%s716 + $0x4] sm:$0xf]
          %v719 = vld [vmem:[%s716 + $0x8] sm:$0xf]
          %v720 = vld [vmem:[%s716 + $0xc] sm:$0xf]
          %v721 = vld [vmem:[%s716 + $0x10] sm:$0xf]
          %v722 = vld [vmem:[%s716 + $0x14] sm:$0xf]
          %v723 = vld [vmem:[%s716 + $0x18] sm:$0xf]
          %v724 = vld [vmem:[%s716 + $0x1c] sm:$0xf]
          %v725 = vld [vmem:[%s716 + $0x20] sm:$0xf]
          %v726 = vld [vmem:[%s716 + $0x24] sm:$0xf]
          %v727 = vld [vmem:[%s716 + $0x28] sm:$0xf]
          %v728 = vld [vmem:[%s716 + $0x2c] sm:$0xf]
          %v729 = vld [vmem:[%s716 + $0x30] sm:$0xf]
          %v730 = vld [vmem:[%s716 + $0x34] sm:$0xf]
          %v731 = vld [vmem:[%s716 + $0x38] sm:$0xf]
          %v732 = vld [vmem:[%s716 + $0x3c] sm:$0xf]
          %v733 = vunpack.c.l.bf16 %v717
          %v734 = vunpack.c.l.bf16 %v718
          %v735 = vunpack.c.l.bf16 %v719
          %v736 = vunpack.c.l.bf16 %v720
          %v737 = vunpack.c.l.bf16 %v721
          %v738 = vunpack.c.l.bf16 %v722
          %v739 = vunpack.c.l.bf16 %v723
          %v740 = vunpack.c.l.bf16 %v724
          %v741 = vunpack.c.l.bf16 %v725
          %v742 = vunpack.c.l.bf16 %v726
          %v743 = vunpack.c.l.bf16 %v727
          %v744 = vunpack.c.l.bf16 %v728
          %v745 = vunpack.c.l.bf16 %v729
          %v746 = vunpack.c.l.bf16 %v730
          %v747 = vunpack.c.l.bf16 %v731
          %v748 = vunpack.c.l.bf16 %v732
          %v749 = vld [vmem:[#allocation6] sm:$0x1]
          %v751 = vperm.slane %v749, 0
          %v753 = vmul.f32 %v733, %v751
          %v754 = vmul.f32 %v734, %v751
          %v755 = vmul.f32 %v735, %v751
          %v756 = vmul.f32 %v736, %v751
          %v757 = vmul.f32 %v737, %v751
          %v758 = vmul.f32 %v738, %v751
          %v759 = vmul.f32 %v739, %v751
          %v760 = vmul.f32 %v740, %v751
          %v761 = vmul.f32 %v741, %v751
          %v762 = vmul.f32 %v742, %v751
          %v763 = vmul.f32 %v743, %v751
          %v764 = vmul.f32 %v744, %v751
          %v765 = vmul.f32 %v745, %v751
          %v766 = vmul.f32 %v746, %v751
          %v767 = vmul.f32 %v747, %v751
          %v768 = vmul.f32 %v748, %v751
          %v769 = vld [vmem:[#allocation7] sm:$0x1]
          %v771 = vperm.slane %v769, 0
          %v773 = vadd.f32 %v753, %v771
          %v774 = vadd.f32 %v754, %v771
          %v775 = vadd.f32 %v755, %v771
          %v776 = vadd.f32 %v756, %v771
          %v777 = vadd.f32 %v757, %v771
          %v778 = vadd.f32 %v758, %v771
          %v779 = vadd.f32 %v759, %v771
          %v780 = vadd.f32 %v760, %v771
          %v781 = vadd.f32 %v761, %v771
          %v782 = vadd.f32 %v762, %v771
          %v783 = vadd.f32 %v763, %v771
          %v784 = vadd.f32 %v764, %v771
          %v785 = vadd.f32 %v765, %v771
          %v786 = vadd.f32 %v766, %v771
          %v787 = vadd.f32 %v767, %v771
          %v788 = vadd.f32 %v768, %v771
          %v789 = vmax.f32 %v773, 0.0
          %v790 = vmax.f32 %v774, 0.0
          %v791 = vmax.f32 %v775, 0.0
          %v792 = vmax.f32 %v776, 0.0
          %v793 = vmax.f32 %v777, 0.0
          %v794 = vmax.f32 %v778, 0.0
          %v795 = vmax.f32 %v779, 0.0
          %v796 = vmax.f32 %v780, 0.0
          %v797 = vmax.f32 %v781, 0.0
          %v798 = vmax.f32 %v782, 0.0
          %v799 = vmax.f32 %v783, 0.0
          %v800 = vmax.f32 %v784, 0.0
          %v801 = vmax.f32 %v785, 0.0
          %v802 = vmax.f32 %v786, 0.0
          %v803 = vmax.f32 %v787, 0.0
          %v804 = vmax.f32 %v788, 0.0
          %v805 = vpack.c.bf16 %v789, %v789
          %v806 = vpack.c.bf16 %v790, %v790
          %v807 = vpack.c.bf16 %v791, %v791
          %v808 = vpack.c.bf16 %v792, %v792
          %v809 = vpack.c.bf16 %v793, %v793
          %v810 = vpack.c.bf16 %v794, %v794
          %v811 = vpack.c.bf16 %v795, %v795
          %v812 = vpack.c.bf16 %v796, %v796
          %v813 = vpack.c.bf16 %v797, %v797
          %v814 = vpack.c.bf16 %v798, %v798
          %v815 = vpack.c.bf16 %v799, %v799
          %v816 = vpack.c.bf16 %v800, %v800
          %v817 = vpack.c.bf16 %v801, %v801
          %v818 = vpack.c.bf16 %v802, %v802
          %v819 = vpack.c.bf16 %v803, %v803
          %v820 = vpack.c.bf16 %v804, %v804
          %821 = vst [vmem:[%s716] sm:$0xf] %v805
          %822 = vst [vmem:[%s716 + $0x4] sm:$0xf] %v806
          %823 = vst [vmem:[%s716 + $0x8] sm:$0xf] %v807
          %824 = vst [vmem:[%s716 + $0xc] sm:$0xf] %v808
          %825 = vst [vmem:[%s716 + $0x10] sm:$0xf] %v809
          %826 = vst [vmem:[%s716 + $0x14] sm:$0xf] %v810
          %827 = vst [vmem:[%s716 + $0x18] sm:$0xf] %v811
          %828 = vst [vmem:[%s716 + $0x1c] sm:$0xf] %v812
          %829 = vst [vmem:[%s716 + $0x20] sm:$0xf] %v813
          %830 = vst [vmem:[%s716 + $0x24] sm:$0xf] %v814
          %831 = vst [vmem:[%s716 + $0x28] sm:$0xf] %v815
          %832 = vst [vmem:[%s716 + $0x2c] sm:$0xf] %v816
          %833 = vst [vmem:[%s716 + $0x30] sm:$0xf] %v817
          %834 = vst [vmem:[%s716 + $0x34] sm:$0xf] %v818
          %835 = vst [vmem:[%s716 + $0x38] sm:$0xf] %v819
          %836 = vst [vmem:[%s716 + $0x3c] sm:$0xf] %v820
        $region68: #{gcn_forward.1} parent=63 // pred_fallthru
          _
        %v837 = vld [vmem:[#allocation2] sm:$0xff]
        %v838 = vld [vmem:[#allocation2 + $0x8] sm:$0xff]
        %v839 = vld [vmem:[#allocation2 + $0x10] sm:$0xff]
        %v840 = vld [vmem:[#allocation2 + $0x18] sm:$0xff]
        %v841 = vld [vmem:[#allocation2 + $0x20] sm:$0xff]
        %v842 = vld [vmem:[#allocation2 + $0x28] sm:$0xff]
        %v843 = vld [vmem:[#allocation2 + $0x30] sm:$0xff]
        %v844 = vld [vmem:[#allocation2 + $0x38] sm:$0xff]
        %v845 = vld [vmem:[#allocation2 + $0x40] sm:$0xff]
        %v846 = vld [vmem:[#allocation2 + $0x48] sm:$0xff]
        %v847 = vld [vmem:[#allocation2 + $0x50] sm:$0xff]
        %v848 = vld [vmem:[#allocation2 + $0x58] sm:$0xff]
        %v849 = vld [vmem:[#allocation2 + $0x60] sm:$0xff]
        %v850 = vld [vmem:[#allocation2 + $0x68] sm:$0xff]
        %v851 = vld [vmem:[#allocation2 + $0x70] sm:$0xff]
        %v852 = vld [vmem:[#allocation2 + $0x78] sm:$0xff]
        %s853 = smul.u32 %s23, 128
        %s854 = sshra.s32 %s681, 7
        %s855 = sand.u32 %s681, 127
        %s856 = sshra.s32 %s853, 3
        %s857 = sand.u32 %s853, 7
        %s858 = sadd.s32 %s854, %s856
        %s859 = smul.addr %s858, 4
        %s860 = scalar_lea.vmem %s0, %s859
        %v861 = vld [vmem:[%s860] sm:$0xf]
        %v862 = vld [vmem:[%s860 + $0x4] sm:$0xf]
        %v863 = vld [vmem:[%s860 + $0x8] sm:$0xf]
        %v864 = vld [vmem:[%s860 + $0xc] sm:$0xf]
        %v865 = vld [vmem:[%s860 + $0x10] sm:$0xf]
        %v866 = vld [vmem:[%s860 + $0x14] sm:$0xf]
        %v867 = vld [vmem:[%s860 + $0x18] sm:$0xf]
        %v868 = vld [vmem:[%s860 + $0x1c] sm:$0xf]
        %v869 = vld [vmem:[%s860 + $0x20] sm:$0xf]
        %v870 = vld [vmem:[%s860 + $0x24] sm:$0xf]
        %v871 = vld [vmem:[%s860 + $0x28] sm:$0xf]
        %v872 = vld [vmem:[%s860 + $0x2c] sm:$0xf]
        %v873 = vld [vmem:[%s860 + $0x30] sm:$0xf]
        %v874 = vld [vmem:[%s860 + $0x34] sm:$0xf]
        %v875 = vld [vmem:[%s860 + $0x38] sm:$0xf]
        %v876 = vld [vmem:[%s860 + $0x3c] sm:$0xf]
        %s877 = sshra.s32 %s681, 3
        %s878 = sand.u32 %s681, 7
        %s879 = smul.addr %s877, 4
        %s880 = scalar_lea.vmem [#allocation3], %s879
        %v881 = vld [vmem:[%s880] sm:$0xf]
        %v882 = vld [vmem:[%s880 + $0x4] sm:$0xf]
        %v883 = vld [vmem:[%s880 + $0x8] sm:$0xf]
        %v884 = vld [vmem:[%s880 + $0xc] sm:$0xf]
        %v885 = vld [vmem:[%s880 + $0x10] sm:$0xf]
        %v886 = vld [vmem:[%s880 + $0x14] sm:$0xf]
        %v887 = vld [vmem:[%s880 + $0x18] sm:$0xf]
        %v888 = vld [vmem:[%s880 + $0x1c] sm:$0xf]
        %v889 = vld [vmem:[%s880 + $0x20] sm:$0xf]
        %v890 = vld [vmem:[%s880 + $0x24] sm:$0xf]
        %v891 = vld [vmem:[%s880 + $0x28] sm:$0xf]
        %v892 = vld [vmem:[%s880 + $0x2c] sm:$0xf]
        %v893 = vld [vmem:[%s880 + $0x30] sm:$0xf]
        %v894 = vld [vmem:[%s880 + $0x34] sm:$0xf]
        %v895 = vld [vmem:[%s880 + $0x38] sm:$0xf]
        %v896 = vld [vmem:[%s880 + $0x3c] sm:$0xf]
        %v913 = vunpack.c.l.b16 %v861
        %v914 = vunpack.c.l.b16 %v862
        %v915 = vunpack.c.l.b16 %v863
        %v916 = vunpack.c.l.b16 %v864
        %v917 = vunpack.c.l.b16 %v865
        %v918 = vunpack.c.l.b16 %v866
        %v919 = vunpack.c.l.b16 %v867
        %v920 = vunpack.c.l.b16 %v868
        %v921 = vunpack.c.l.b16 %v869
        %v922 = vunpack.c.l.b16 %v870
        %v923 = vunpack.c.l.b16 %v871
        %v924 = vunpack.c.l.b16 %v872
        %v925 = vunpack.c.l.b16 %v873
        %v926 = vunpack.c.l.b16 %v874
        %v927 = vunpack.c.l.b16 %v875
        %v928 = vunpack.c.l.b16 %v876
        %v929 = vpack.c.b16 %v914, %v913
        %v930 = vpack.c.b16 %v916, %v915
        %v931 = vpack.c.b16 %v918, %v917
        %v932 = vpack.c.b16 %v920, %v919
        %v933 = vpack.c.b16 %v922, %v921
        %v934 = vpack.c.b16 %v924, %v923
        %v935 = vpack.c.b16 %v926, %v925
        %v936 = vpack.c.b16 %v928, %v927
        %v961 = vunpack.c.l.b16 %v881
        %v962 = vunpack.c.l.b16 %v882
        %v963 = vunpack.c.l.b16 %v883
        %v964 = vunpack.c.l.b16 %v884
        %v965 = vunpack.c.l.b16 %v885
        %v966 = vunpack.c.l.b16 %v886
        %v967 = vunpack.c.l.b16 %v887
        %v968 = vunpack.c.l.b16 %v888
        %v969 = vunpack.c.l.b16 %v889
        %v970 = vunpack.c.l.b16 %v890
        %v971 = vunpack.c.l.b16 %v891
        %v972 = vunpack.c.l.b16 %v892
        %v973 = vunpack.c.l.b16 %v893
        %v974 = vunpack.c.l.b16 %v894
        %v975 = vunpack.c.l.b16 %v895
        %v976 = vunpack.c.l.b16 %v896
        %v977 = vpack.c.b16 %v962, %v961
        %v978 = vpack.c.b16 %v964, %v963
        %v979 = vpack.c.b16 %v966, %v965
        %v980 = vpack.c.b16 %v968, %v967
        %v981 = vpack.c.b16 %v970, %v969
        %v982 = vpack.c.b16 %v972, %v971
        %v983 = vpack.c.b16 %v974, %v973
        %v984 = vpack.c.b16 %v976, %v975
        %993 = vmatpush.bf16.msra.mxu0 %v984
        %994 = vmatpush.bf16.msra.mxu0 %v983
        %995 = vmatpush.bf16.msra.mxu0 %v982
        %996 = vmatpush.bf16.msra.mxu0 %v981
        %997 = vmatpush.bf16.msra.mxu0 %v980
        %998 = vmatpush.bf16.msra.mxu0 %v979
        %999 = vmatpush.bf16.msra.mxu0 %v978
        %1000 = vmatpush.bf16.msra.mxu0 %v977
        %1001 = vmatmul.bf16.gmra.mxu0 %v929
        %v1002 = vpop.f32.mrf.mxu0
        %v1003 = vadd.f32 0.0, %v1002
        %v1004 = vpop.f32.mrf.mxu0
        %v1005 = vadd.f32 0.0, %v1004
        %1006 = vmatmul.bf16.gmra.mxu0 %v930
        %v1007 = vpop.f32.mrf.mxu0
        %v1008 = vadd.f32 0.0, %v1007
        %v1009 = vpop.f32.mrf.mxu0
        %v1010 = vadd.f32 0.0, %v1009
        %1011 = vmatmul.bf16.gmra.mxu0 %v931
        %v1012 = vpop.f32.mrf.mxu0
        %v1013 = vadd.f32 0.0, %v1012
        %v1014 = vpop.f32.mrf.mxu0
        %v1015 = vadd.f32 0.0, %v1014
        %1016 = vmatmul.bf16.gmra.mxu0 %v932
        %v1017 = vpop.f32.mrf.mxu0
        %v1018 = vadd.f32 0.0, %v1017
        %v1019 = vpop.f32.mrf.mxu0
        %v1020 = vadd.f32 0.0, %v1019
        %1021 = vmatmul.bf16.gmra.mxu0 %v933
        %v1022 = vpop.f32.mrf.mxu0
        %v1023 = vadd.f32 0.0, %v1022
        %v1024 = vpop.f32.mrf.mxu0
        %v1025 = vadd.f32 0.0, %v1024
        %1026 = vmatmul.bf16.gmra.mxu0 %v934
        %v1027 = vpop.f32.mrf.mxu0
        %v1028 = vadd.f32 0.0, %v1027
        %v1029 = vpop.f32.mrf.mxu0
        %v1030 = vadd.f32 0.0, %v1029
        %1031 = vmatmul.bf16.gmra.mxu0 %v935
        %v1032 = vpop.f32.mrf.mxu0
        %v1033 = vadd.f32 0.0, %v1032
        %v1034 = vpop.f32.mrf.mxu0
        %v1035 = vadd.f32 0.0, %v1034
        %1036 = vmatmul.bf16.gmra.mxu0 %v936
        %v1037 = vpop.f32.mrf.mxu0
        %v1038 = vadd.f32 0.0, %v1037
        %v1039 = vpop.f32.mrf.mxu0
        %v1040 = vadd.f32 0.0, %v1039
        %1041 = vdwg.mxu0
        %v1042 = vadd.f32 %v837, %v1003
        %v1043 = vadd.f32 %v838, %v1005
        %v1044 = vadd.f32 %v839, %v1008
        %v1045 = vadd.f32 %v840, %v1010
        %v1046 = vadd.f32 %v841, %v1013
        %v1047 = vadd.f32 %v842, %v1015
        %v1048 = vadd.f32 %v843, %v1018
        %v1049 = vadd.f32 %v844, %v1020
        %v1050 = vadd.f32 %v845, %v1023
        %v1051 = vadd.f32 %v846, %v1025
        %v1052 = vadd.f32 %v847, %v1028
        %v1053 = vadd.f32 %v848, %v1030
        %v1054 = vadd.f32 %v849, %v1033
        %v1055 = vadd.f32 %v850, %v1035
        %v1056 = vadd.f32 %v851, %v1038
        %v1057 = vadd.f32 %v852, %v1040
        %1058 = vst [vmem:[#allocation2] sm:$0xff] %v1042
        %1059 = vst [vmem:[#allocation2 + $0x8] sm:$0xff] %v1043
        %1060 = vst [vmem:[#allocation2 + $0x10] sm:$0xff] %v1044
        %1061 = vst [vmem:[#allocation2 + $0x18] sm:$0xff] %v1045
        %1062 = vst [vmem:[#allocation2 + $0x20] sm:$0xff] %v1046
        %1063 = vst [vmem:[#allocation2 + $0x28] sm:$0xff] %v1047
        %1064 = vst [vmem:[#allocation2 + $0x30] sm:$0xff] %v1048
        %1065 = vst [vmem:[#allocation2 + $0x38] sm:$0xff] %v1049
        %1066 = vst [vmem:[#allocation2 + $0x40] sm:$0xff] %v1050
        %1067 = vst [vmem:[#allocation2 + $0x48] sm:$0xff] %v1051
        %1068 = vst [vmem:[#allocation2 + $0x50] sm:$0xff] %v1052
        %1069 = vst [vmem:[#allocation2 + $0x58] sm:$0xff] %v1053
        %1070 = vst [vmem:[#allocation2 + $0x60] sm:$0xff] %v1054
        %1071 = vst [vmem:[#allocation2 + $0x68] sm:$0xff] %v1055
        %1072 = vst [vmem:[#allocation2 + $0x70] sm:$0xff] %v1056
        %1073 = vst [vmem:[#allocation2 + $0x78] sm:$0xff] %v1057
        // Predicated region
        $region73: #{gcn_forward.1} parent=63 // pred_check
          %p1074 = pneg %p293
        $region74: #{gcn_forward.1} parent=63 // pred_check_branch
          %1076 = sbr.rel (%p1074) target = $region76
        $region75: #{gcn_forward.1} parent=63 // pred_region
          %v1077 = vld [vmem:[#allocation2] sm:$0xff]
          %v1078 = vld [vmem:[#allocation2 + $0x8] sm:$0xff]
          %v1079 = vld [vmem:[#allocation2 + $0x10] sm:$0xff]
          %v1080 = vld [vmem:[#allocation2 + $0x18] sm:$0xff]
          %v1081 = vld [vmem:[#allocation2 + $0x20] sm:$0xff]
          %v1082 = vld [vmem:[#allocation2 + $0x28] sm:$0xff]
          %v1083 = vld [vmem:[#allocation2 + $0x30] sm:$0xff]
          %v1084 = vld [vmem:[#allocation2 + $0x38] sm:$0xff]
          %v1085 = vld [vmem:[#allocation2 + $0x40] sm:$0xff]
          %v1086 = vld [vmem:[#allocation2 + $0x48] sm:$0xff]
          %v1087 = vld [vmem:[#allocation2 + $0x50] sm:$0xff]
          %v1088 = vld [vmem:[#allocation2 + $0x58] sm:$0xff]
          %v1089 = vld [vmem:[#allocation2 + $0x60] sm:$0xff]
          %v1090 = vld [vmem:[#allocation2 + $0x68] sm:$0xff]
          %v1091 = vld [vmem:[#allocation2 + $0x70] sm:$0xff]
          %v1092 = vld [vmem:[#allocation2 + $0x78] sm:$0xff]
          %v1093 = vld [vmem:[%s4] sm:$0xff]
          %v1094 = vld [vmem:[%s4 + $0x8] sm:$0xff]
          %v1095 = vld [vmem:[%s4 + $0x10] sm:$0xff]
          %v1096 = vld [vmem:[%s4 + $0x18] sm:$0xff]
          %v1097 = vld [vmem:[%s4 + $0x20] sm:$0xff]
          %v1098 = vld [vmem:[%s4 + $0x28] sm:$0xff]
          %v1099 = vld [vmem:[%s4 + $0x30] sm:$0xff]
          %v1100 = vld [vmem:[%s4 + $0x38] sm:$0xff]
          %v1101 = vld [vmem:[%s4 + $0x40] sm:$0xff]
          %v1102 = vld [vmem:[%s4 + $0x48] sm:$0xff]
          %v1103 = vld [vmem:[%s4 + $0x50] sm:$0xff]
          %v1104 = vld [vmem:[%s4 + $0x58] sm:$0xff]
          %v1105 = vld [vmem:[%s4 + $0x60] sm:$0xff]
          %v1106 = vld [vmem:[%s4 + $0x68] sm:$0xff]
          %v1107 = vld [vmem:[%s4 + $0x70] sm:$0xff]
          %v1108 = vld [vmem:[%s4 + $0x78] sm:$0xff]
          %v1109 = vld [vmem:[%s5] sm:$0x1]
          %v1111 = vperm.slane %v1109, 0
          %1113 = vmatpush.msra.mxu0 %v1108
          %1114 = vmatpush.msra.mxu0 %v1107
          %1115 = vmatpush.msra.mxu0 %v1106
          %1116 = vmatpush.msra.mxu0 %v1105
          %1117 = vmatpush.msra.mxu0 %v1104
          %1118 = vmatpush.msra.mxu0 %v1103
          %1119 = vmatpush.msra.mxu0 %v1102
          %1120 = vmatpush.msra.mxu0 %v1101
          %1121 = vmatpush.msra.mxu0 %v1100
          %1122 = vmatpush.msra.mxu0 %v1099
          %1123 = vmatpush.msra.mxu0 %v1098
          %1124 = vmatpush.msra.mxu0 %v1097
          %1125 = vmatpush.msra.mxu0 %v1096
          %1126 = vmatpush.msra.mxu0 %v1095
          %1127 = vmatpush.msra.mxu0 %v1094
          %1128 = vmatpush.msra.mxu0 %v1093
          %1129 = vmatmul.f32.gmra.mxu0 %v1077
          %v1130 = vpop.f32.mrf.mxu0
          %v1131 = vadd.f32 %v1111, %v1130
          %1132 = vmatmul.f32.gmra.mxu0 %v1078
          %v1133 = vpop.f32.mrf.mxu0
          %v1134 = vadd.f32 %v1111, %v1133
          %1135 = vmatmul.f32.gmra.mxu0 %v1079
          %v1136 = vpop.f32.mrf.mxu0
          %v1137 = vadd.f32 %v1111, %v1136
          %1138 = vmatmul.f32.gmra.mxu0 %v1080
          %v1139 = vpop.f32.mrf.mxu0
          %v1140 = vadd.f32 %v1111, %v1139
          %1141 = vmatmul.f32.gmra.mxu0 %v1081
          %v1142 = vpop.f32.mrf.mxu0
          %v1143 = vadd.f32 %v1111, %v1142
          %1144 = vmatmul.f32.gmra.mxu0 %v1082
          %v1145 = vpop.f32.mrf.mxu0
          %v1146 = vadd.f32 %v1111, %v1145
          %1147 = vmatmul.f32.gmra.mxu0 %v1083
          %v1148 = vpop.f32.mrf.mxu0
          %v1149 = vadd.f32 %v1111, %v1148
          %1150 = vmatmul.f32.gmra.mxu0 %v1084
          %v1151 = vpop.f32.mrf.mxu0
          %v1152 = vadd.f32 %v1111, %v1151
          %1153 = vmatmul.f32.gmra.mxu0 %v1085
          %v1154 = vpop.f32.mrf.mxu0
          %v1155 = vadd.f32 %v1111, %v1154
          %1156 = vmatmul.f32.gmra.mxu0 %v1086
          %v1157 = vpop.f32.mrf.mxu0
          %v1158 = vadd.f32 %v1111, %v1157
          %1159 = vmatmul.f32.gmra.mxu0 %v1087
          %v1160 = vpop.f32.mrf.mxu0
          %v1161 = vadd.f32 %v1111, %v1160
          %1162 = vmatmul.f32.gmra.mxu0 %v1088
          %v1163 = vpop.f32.mrf.mxu0
          %v1164 = vadd.f32 %v1111, %v1163
          %1165 = vmatmul.f32.gmra.mxu0 %v1089
          %v1166 = vpop.f32.mrf.mxu0
          %v1167 = vadd.f32 %v1111, %v1166
          %1168 = vmatmul.f32.gmra.mxu0 %v1090
          %v1169 = vpop.f32.mrf.mxu0
          %v1170 = vadd.f32 %v1111, %v1169
          %1171 = vmatmul.f32.gmra.mxu0 %v1091
          %v1172 = vpop.f32.mrf.mxu0
          %v1173 = vadd.f32 %v1111, %v1172
          %1174 = vmatmul.f32.gmra.mxu0 %v1092
          %v1175 = vpop.f32.mrf.mxu0
          %v1176 = vadd.f32 %v1111, %v1175
          %1177 = vdwg.mxu0
          %1178 = vst [vmem:[%s290] sm:$0xff] %v1131
          %1179 = vst [vmem:[%s290 + $0x8] sm:$0xff] %v1134
          %1180 = vst [vmem:[%s290 + $0x10] sm:$0xff] %v1137
          %1181 = vst [vmem:[%s290 + $0x18] sm:$0xff] %v1140
          %1182 = vst [vmem:[%s290 + $0x20] sm:$0xff] %v1143
          %1183 = vst [vmem:[%s290 + $0x28] sm:$0xff] %v1146
          %1184 = vst [vmem:[%s290 + $0x30] sm:$0xff] %v1149
          %1185 = vst [vmem:[%s290 + $0x38] sm:$0xff] %v1152
          %1186 = vst [vmem:[%s290 + $0x40] sm:$0xff] %v1155
          %1187 = vst [vmem:[%s290 + $0x48] sm:$0xff] %v1158
          %1188 = vst [vmem:[%s290 + $0x50] sm:$0xff] %v1161
          %1189 = vst [vmem:[%s290 + $0x58] sm:$0xff] %v1164
          %1190 = vst [vmem:[%s290 + $0x60] sm:$0xff] %v1167
          %1191 = vst [vmem:[%s290 + $0x68] sm:$0xff] %v1170
          %1192 = vst [vmem:[%s290 + $0x70] sm:$0xff] %v1173
          %1193 = vst [vmem:[%s290 + $0x78] sm:$0xff] %v1176
        $region76: #{gcn_forward.1} parent=63 // pred_fallthru
          _
      $region64: #{gcn_forward.1} parent=43 // pred_fallthru
        _
      %s1194 = smul.u32 %s23, %s22
      %s1195 = smul.u32 16, %s1194
      %p1196 = scmp.lt.s32.totalorder %s1195, 15
      %s1197 = scalar_select %p1196, %s1195, 15
      %s1198 = smul.addr %s1197, 8
      %s1199 = scalar_lea.vmem %s6, %s1198
      // Predicated region
      $region77: #{gcn_forward.1} parent=43 // pred_check
        %p1200 = pneg %p191
      $region78: #{gcn_forward.1} parent=43 // pred_check_branch
        %1202 = sbr.rel (%p1200) target = $region80
      $region79: #{gcn_forward.1} parent=43 // pred_region
        %s1203 = smul.u32 %s23, %s22
        %s1204 = smul.u32 16, %s1203
      $region80: #{gcn_forward.1} parent=43 // pred_fallthru
        _
    $region44: #{gcn_forward.1} parent=5 // pred_fallthru
      _
    %p1205 = scmp.le.s32.totalorder 2, %s12
    // Predicated region
    $region81: #{gcn_forward.1} parent=5 // pred_check
      %p1206 = pneg %p1205
    $region82: #{gcn_forward.1} parent=5 // pred_check_branch
      %1208 = sbr.rel (%p1206) target = $region84
    $region83: #{gcn_forward.1} parent=5 // pred_region
      %s1209 = ssub.s32 %s12, 2
      // Predicated region
      $region85: #{gcn_forward.1} parent=83 // pred_check
        %p1210 = pneg %p197
      $region86: #{gcn_forward.1} parent=83 // pred_check_branch
        %1212 = sbr.rel (%p1210) target = $region88
      $region87: #{gcn_forward.1} parent=83 // pred_region
        %s1213 = smul.u32 %s26, %s25
        %s1214 = smul.u32 16, %s1213
        %p1215 = scmp.lt.s32.totalorder %s1214, 15
        %s1216 = scalar_select %p1215, %s1214, 15
        %s1217 = smul.addr %s1216, 8
        %s1218 = scalar_lea.vmem %s6, %s1217
      $region88: #{gcn_forward.1} parent=83 // pred_fallthru
        _
    $region84: #{gcn_forward.1} parent=5 // pred_fallthru
      _
  $region6: #{gcn_forward.1} parent=0 // loop_footer
    %s16 = sadd.s32 1, %s12
  $region7: #{gcn_forward.1} parent=0 // loop_footer_branch
    %11 = sbr.rel target = $region3
  $region8: #{gcn_forward.1} parent=0 // loop_exit
    _

</llo_original>
